<compile_context>
chip_gen: v7x
topology: tpu7x:2x2x1
jax: 0.10.0
libtpu: 0.0.40
codegen_flags: <defaults>
</compile_context>

<pallas_src>
import functools

import jax
import jax.numpy as jnp
from jax import lax
from jax.experimental import pallas as pl
from jax.experimental.pallas import tpu as pltpu


def _round_up(v, m):
    return ((v + m - 1) // m) * m


def _snn_kernel(cur1_ref, wrt_ref, w2t_ref, b2_ref, spk2_ref, spk1_ref,
                *, alpha1, beta1, thr1, alpha2, beta2, thr2, unroll):
    """Fused lif1 (RSynaptic) -> fc2 -> lif2 (Synaptic) time recurrence.

    cur1_ref : (T, Bp, Hp) fc1 output with b1+brec folded in (precomputed, padded).
    wrt_ref  : (Hp, Hp) recurrent weight, transposed, zero padded.
    w2t_ref  : (Hp, Op) fc2 weight, transposed, zero padded.
    b2_ref   : (1, Op)  fc2 bias, zero padded.
    spk2_ref : (T, Bp, Op) output spike record of lif2.
    spk1_ref : (T, Bp, Hp) output spike record of lif1.
    """
    T, Bp, Hp = cur1_ref.shape
    Op = b2_ref.shape[1]

    # Loop-invariant operands hoisted out of the time loop.
    wrt = wrt_ref[...]
    w2t = w2t_ref[...]
    b2 = b2_ref[...]
    # Note: a further step would stage `wrt` in MXU weight registers once via
    # pltpu.matmul_push_rhs / matmul_acc_lhs / matmul_pop; jnp.dot is kept here for
    # robustness across TPU generations.

    def step(t, carry):
        spk1, syn1, mem1, syn2, mem2 = carry

        # ---- lif1: RSynaptic, all-to-all recurrent, reset='zero' ----
        rec1 = jnp.dot(spk1, wrt, preferred_element_type=jnp.float32)
        syn1 = alpha1 * syn1 + cur1_ref[t] + rec1            # syn is NOT reset
        # reset from mem_prev; mem_new = (1 - reset) * (beta*mem_prev + syn_new)
        mem1 = jnp.where(mem1 > thr1, 0.0, beta1 * mem1 + syn1)
        spk1 = (mem1 > thr1).astype(jnp.float32)
        spk1_ref[t] = spk1

        # ---- fc2 + lif2 (Synaptic, reset='zero'), fused into the same timestep ----
        # Independent of the next step's recurrent matmul -> overlaps on the MXU.
        cur2 = jnp.dot(spk1, w2t, preferred_element_type=jnp.float32) + b2
        syn2 = alpha2 * syn2 + cur2
        mem2 = jnp.where(mem2 > thr2, 0.0, beta2 * mem2 + syn2)
        spk2_ref[t] = (mem2 > thr2).astype(jnp.float32)

        return spk1, syn1, mem1, syn2, mem2

    zero_h = jnp.zeros((Bp, Hp), jnp.float32)
    zero_o = jnp.zeros((Bp, Op), jnp.float32)
    lax.fori_loop(0, T, step, (zero_h, zero_h, zero_h, zero_o, zero_o),
                  unroll=unroll)


def imported_network_forward(x, w1, b1, wrec, brec, w2, b2,
                             *, alpha1, beta1, thr1, alpha2, beta2, thr2):
    """x: (T, B, I) float32.  Weights in PyTorch convention (out_features, in_features)."""
    f32 = jnp.float32
    x = jnp.asarray(x, f32)
    T, B, I = x.shape
    w1 = jnp.asarray(w1, f32)
    b1 = jnp.asarray(b1, f32)
    wrec = jnp.asarray(wrec, f32)
    brec = jnp.asarray(brec, f32)
    w2 = jnp.asarray(w2, f32)
    b2 = jnp.asarray(b2, f32)
    H = w1.shape[0]
    O = w2.shape[0]

    # Pad to the native f32 vreg tile: batch -> multiple of 8, features -> multiple of 128.
    Bp = _round_up(B, 8)
    Hp = _round_up(H, 128)
    Op = _round_up(O, 128)

    # fc1 on UNPADDED shapes (state-independent), with b1 + brec folded once; only the
    # result is padded to (T, Bp, Hp) for the kernel.
    cur1 = jnp.einsum('tbi,hi->tbh', x, w1) + (b1 + brec)            # (T, B, H)
    cur1_p = jnp.zeros((T, Bp, Hp), f32).at[:, :B, :H].set(cur1)

    # Zero-padded weights: padded hidden/output lanes can never contaminate real lanes.
    wrt = jnp.zeros((Hp, Hp), f32).at[:H, :H].set(wrec.T)
    w2t = jnp.zeros((Hp, Op), f32).at[:H, :O].set(w2.T)
    b2p = jnp.zeros((1, Op), f32).at[0, :O].set(b2)

    kernel = functools.partial(
        _snn_kernel,
        alpha1=float(alpha1), beta1=float(beta1), thr1=float(thr1),
        alpha2=float(alpha2), beta2=float(beta2), thr2=float(thr2),
        unroll=max(1, min(8, int(T))))   # partial unroll: scheduler visibility, no blowup

    vmem = pl.BlockSpec(memory_space=pltpu.MemorySpace.VMEM)

    # Explicit VMEM budget with headroom (default scoped limit is 16 MiB on v5e).
    resident = 4 * (T * Bp * (2 * Hp + Op) + Hp * Hp + Hp * Op + Op)
    vmem_limit = int(min(64 * 1024 * 1024, max(32 * 1024 * 1024, 2 * resident)))
    # For very long sequences (2*resident > ~64 MiB, the v7x physical VMEM), chunk T via a
    # grid axis marked 'arbitrary' carrying (spk1, syn1, mem1, syn2, mem2) in scratch; at
    # larger batch, add a leading 'parallel' batch-block axis to use both v7x TensorCores.

    spk2_p, spk1_p = pl.pallas_call(
        kernel,
        out_shape=(jax.ShapeDtypeStruct((T, Bp, Op), f32),    # spk2_rec (padded)
                   jax.ShapeDtypeStruct((T, Bp, Hp), f32)),   # spk1_rec (padded)
        in_specs=[vmem, vmem, vmem, vmem],
        out_specs=(vmem, vmem),
        compiler_params=pltpu.CompilerParams(vmem_limit_bytes=vmem_limit),
    )(cur1_p, wrt, w2t, b2p)

    return spk2_p[:, :B, :O], spk1_p[:, :B, :H]


def reference_forward(x, w1, b1, wrec, brec, w2, b2,
                      *, alpha1, beta1, thr1, alpha2, beta2, thr2):
    """Pure-JAX reference matching snnTorch semantics (for verification)."""
    T, B, I = x.shape
    H = w1.shape[0]
    O = w2.shape[0]

    def step(carry, x_t):
        spk1, syn1, mem1, syn2, mem2 = carry
        cur1 = x_t @ w1.T + b1
        rec1 = spk1 @ wrec.T + brec
        reset1 = (mem1 > thr1).astype(jnp.float32)
        syn1 = alpha1 * syn1 + cur1 + rec1
        mem1 = (1.0 - reset1) * (beta1 * mem1 + syn1)
        spk1 = (mem1 > thr1).astype(jnp.float32)

        cur2 = spk1 @ w2.T + b2
        reset2 = (mem2 > thr2).astype(jnp.float32)
        syn2 = alpha2 * syn2 + cur2
        mem2 = (1.0 - reset2) * (beta2 * mem2 + syn2)
        spk2 = (mem2 > thr2).astype(jnp.float32)
        return (spk1, syn1, mem1, syn2, mem2), (spk2, spk1)

    init = (jnp.zeros((B, H)), jnp.zeros((B, H)), jnp.zeros((B, H)),
            jnp.zeros((B, O)), jnp.zeros((B, O)))
    _, (spk2_rec, spk1_rec) = jax.lax.scan(step, init, x)
    return spk2_rec, spk1_rec


if __name__ == "__main__":
    # Small shapes implied by the module: input_size=12, num_outputs=7; pick H=32, T=8, B=2.
    T, B, I, H, O = 8, 2, 12, 32, 7

    key = jax.random.PRNGKey(0)
    ks = jax.random.split(key, 8)

    def uniform_init(k, shape, fan_in):
        bound = 1.0 / jnp.sqrt(float(fan_in))
        return jax.random.uniform(k, shape, jnp.float32, -bound, bound)

    # Deterministic synthetic parameters (PyTorch Linear-style init).
    w1 = uniform_init(ks[0], (H, I), I)
    b1 = uniform_init(ks[1], (H,), I)
    wrec = uniform_init(ks[2], (H, H), H)
    brec = uniform_init(ks[3], (H,), H)
    w2 = uniform_init(ks[4], (O, H), H)
    b2 = uniform_init(ks[5], (O,), H)

    # LIF constants (alpha/beta in (0,1), thresholds) — deterministic.
    lif_params = dict(alpha1=0.9, beta1=0.85, thr1=1.0,
                      alpha2=0.95, beta2=0.8, thr2=1.0)

    # Input drive scaled up so spikes actually occur.
    x = 2.0 * jax.random.normal(ks[6], (T, B, I), jnp.float32)

    spk2_k, spk1_k = imported_network_forward(x, w1, b1, wrec, brec, w2, b2, **lif_params)
    jax.block_until_ready((spk2_k, spk1_k))

    spk2_r, spk1_r = reference_forward(x, w1, b1, wrec, brec, w2, b2, **lif_params)

    assert spk2_k.shape == (T, B, O) and spk1_k.shape == (T, B, H)
    assert jnp.allclose(spk2_k, spk2_r), "spk2 mismatch vs reference"
    assert jnp.allclose(spk1_k, spk1_r), "spk1 mismatch vs reference"

    print("KERNEL_OK")
</pallas_src>

<mosaic_0001>
module attributes {stable_mosaic.version = 11 : i64} {
  func.func @_snn_kernel(%arg0: memref<8x8x128xf32, #tpu.memory_space<vmem>>, %arg1: memref<128x128xf32, #tpu.memory_space<vmem>>, %arg2: memref<128x128xf32, #tpu.memory_space<vmem>>, %arg3: memref<1x128xf32, #tpu.memory_space<vmem>>, %arg4: memref<8x8x128xf32, #tpu.memory_space<vmem>>, %arg5: memref<8x8x128xf32, #tpu.memory_space<vmem>>) attributes {dimension_semantics = [], scalar_prefetch = 0 : i64, scratch_operands = 0 : i64, tpu.core_type = #tpu.core_type<tc>} {
    %c0 = arith.constant 0 : index
    %c0_0 = arith.constant 0 : index
    %0 = vector.load %arg1[%c0, %c0_0] : memref<128x128xf32, #tpu.memory_space<vmem>>, vector<128x128xf32>
    %c0_1 = arith.constant 0 : index
    %c0_2 = arith.constant 0 : index
    %1 = vector.load %arg2[%c0_1, %c0_2] : memref<128x128xf32, #tpu.memory_space<vmem>>, vector<128x128xf32>
    %c0_3 = arith.constant 0 : index
    %c0_4 = arith.constant 0 : index
    %2 = vector.load %arg3[%c0_3, %c0_4] : memref<1x128xf32, #tpu.memory_space<vmem>>, vector<1x128xf32>
    %cst = arith.constant 0.000000e+00 : f32
    %3 = vector.broadcast %cst : f32 to vector<8x128xf32>
    %cst_5 = arith.constant 0.000000e+00 : f32
    %4 = vector.broadcast %cst_5 : f32 to vector<8x128xf32>
    %c0_i32 = arith.constant 0 : i32
    %cst_6 = arith.constant dense<0.000000e+00> : vector<8x128xf32>
    %5 = tpu.matmul %3, %0, %cst_6 {dimension_numbers = #tpu.dot_dimension_numbers<[1], [0], [0], [1], [0, 0, 1, 1], [], []>} : vector<8x128xf32>, vector<128x128xf32>, vector<8x128xf32> -> vector<8x128xf32>
    %cst_7 = arith.constant 0.899999976 : f32
    %6 = vector.broadcast %cst_7 : f32 to vector<8x128xf32>
    %7 = arith.mulf %6, %3 : vector<8x128xf32>
    %8 = arith.index_cast %c0_i32 : i32 to index
    %c0_8 = arith.constant 0 : index
    %c0_9 = arith.constant 0 : index
    %9 = vector.load %arg0[%8, %c0_8, %c0_9] : memref<8x8x128xf32, #tpu.memory_space<vmem>>, vector<1x8x128xf32>
    %10 = vector.shape_cast %9 : vector<1x8x128xf32> to vector<8x128xf32>
    %11 = arith.addf %7, %10 : vector<8x128xf32>
    %12 = arith.addf %11, %5 : vector<8x128xf32>
    %cst_10 = arith.constant 1.000000e+00 : f32
    %13 = vector.broadcast %cst_10 : f32 to vector<8x128xf32>
    %14 = arith.cmpf ogt, %3, %13 : vector<8x128xf32>
    %cst_11 = arith.constant 8.500000e-01 : f32
    %15 = vector.broadcast %cst_11 : f32 to vector<8x128xf32>
    %16 = arith.mulf %15, %3 : vector<8x128xf32>
    %17 = arith.addf %16, %12 : vector<8x128xf32>
    %cst_12 = arith.constant 0.000000e+00 : f32
    %18 = vector.broadcast %cst_12 : f32 to vector<8x128xf32>
    %19 = arith.select %14, %18, %17 : vector<8x128xi1>, vector<8x128xf32>
    %cst_13 = arith.constant 1.000000e+00 : f32
    %20 = vector.broadcast %cst_13 : f32 to vector<8x128xf32>
    %21 = arith.cmpf ogt, %19, %20 : vector<8x128xf32>
    %22 = arith.extui %21 : vector<8x128xi1> to vector<8x128xi32>
    %23 = arith.sitofp %22 : vector<8x128xi32> to vector<8x128xf32>
    %24 = arith.index_cast %c0_i32 : i32 to index
    %c0_14 = arith.constant 0 : index
    %c0_15 = arith.constant 0 : index
    %25 = vector.load %arg5[%24, %c0_14, %c0_15] : memref<8x8x128xf32, #tpu.memory_space<vmem>>, vector<1x8x128xf32>
    %26 = vector.shape_cast %25 : vector<1x8x128xf32> to vector<8x128xf32>
    %27 = vector.shape_cast %23 : vector<8x128xf32> to vector<1x8x128xf32>
    tpu.vector_store %arg5[%24, %c0_14, %c0_15], %27 {strides = array<i32>} : memref<8x8x128xf32, #tpu.memory_space<vmem>>, vector<1x8x128xf32>,
    %cst_16 = arith.constant dense<0.000000e+00> : vector<8x128xf32>
    %28 = tpu.matmul %23, %1, %cst_16 {dimension_numbers = #tpu.dot_dimension_numbers<[1], [0], [0], [1], [0, 0, 1, 1], [], []>} : vector<8x128xf32>, vector<128x128xf32>, vector<8x128xf32> -> vector<8x128xf32>
    %29 = vector.broadcast %2 : vector<1x128xf32> to vector<8x128xf32>
    %30 = arith.addf %28, %29 : vector<8x128xf32>
    %cst_17 = arith.constant 0.949999988 : f32
    %31 = vector.broadcast %cst_17 : f32 to vector<8x128xf32>
    %32 = arith.mulf %31, %4 : vector<8x128xf32>
    %33 = arith.addf %32, %30 : vector<8x128xf32>
    %cst_18 = arith.constant 1.000000e+00 : f32
    %34 = vector.broadcast %cst_18 : f32 to vector<8x128xf32>
    %35 = arith.cmpf ogt, %4, %34 : vector<8x128xf32>
    %cst_19 = arith.constant 8.000000e-01 : f32
    %36 = vector.broadcast %cst_19 : f32 to vector<8x128xf32>
    %37 = arith.mulf %36, %4 : vector<8x128xf32>
    %38 = arith.addf %37, %33 : vector<8x128xf32>
    %cst_20 = arith.constant 0.000000e+00 : f32
    %39 = vector.broadcast %cst_20 : f32 to vector<8x128xf32>
    %40 = arith.select %35, %39, %38 : vector<8x128xi1>, vector<8x128xf32>
    %cst_21 = arith.constant 1.000000e+00 : f32
    %41 = vector.broadcast %cst_21 : f32 to vector<8x128xf32>
    %42 = arith.cmpf ogt, %40, %41 : vector<8x128xf32>
    %43 = arith.extui %42 : vector<8x128xi1> to vector<8x128xi32>
    %44 = arith.sitofp %43 : vector<8x128xi32> to vector<8x128xf32>
    %45 = arith.index_cast %c0_i32 : i32 to index
    %c0_22 = arith.constant 0 : index
    %c0_23 = arith.constant 0 : index
    %46 = vector.load %arg4[%45, %c0_22, %c0_23] : memref<8x8x128xf32, #tpu.memory_space<vmem>>, vector<1x8x128xf32>
    %47 = vector.shape_cast %46 : vector<1x8x128xf32> to vector<8x128xf32>
    %48 = vector.shape_cast %44 : vector<8x128xf32> to vector<1x8x128xf32>
    tpu.vector_store %arg4[%45, %c0_22, %c0_23], %48 {strides = array<i32>} : memref<8x8x128xf32, #tpu.memory_space<vmem>>, vector<1x8x128xf32>,
    %c1_i32 = arith.constant 1 : i32
    %cst_24 = arith.constant dense<0.000000e+00> : vector<8x128xf32>
    %49 = tpu.matmul %23, %0, %cst_24 {dimension_numbers = #tpu.dot_dimension_numbers<[1], [0], [0], [1], [0, 0, 1, 1], [], []>} : vector<8x128xf32>, vector<128x128xf32>, vector<8x128xf32> -> vector<8x128xf32>
    %cst_25 = arith.constant 0.899999976 : f32
    %50 = vector.broadcast %cst_25 : f32 to vector<8x128xf32>
    %51 = arith.mulf %50, %12 : vector<8x128xf32>
    %52 = arith.index_cast %c1_i32 : i32 to index
    %c0_26 = arith.constant 0 : index
    %c0_27 = arith.constant 0 : index
    %53 = vector.load %arg0[%52, %c0_26, %c0_27] : memref<8x8x128xf32, #tpu.memory_space<vmem>>, vector<1x8x128xf32>
    %54 = vector.shape_cast %53 : vector<1x8x128xf32> to vector<8x128xf32>
    %55 = arith.addf %51, %54 : vector<8x128xf32>
    %56 = arith.addf %55, %49 : vector<8x128xf32>
    %cst_28 = arith.constant 1.000000e+00 : f32
    %57 = vector.broadcast %cst_28 : f32 to vector<8x128xf32>
    %58 = arith.cmpf ogt, %19, %57 : vector<8x128xf32>
    %cst_29 = arith.constant 8.500000e-01 : f32
    %59 = vector.broadcast %cst_29 : f32 to vector<8x128xf32>
    %60 = arith.mulf %59, %19 : vector<8x128xf32>
    %61 = arith.addf %60, %56 : vector<8x128xf32>
    %cst_30 = arith.constant 0.000000e+00 : f32
    %62 = vector.broadcast %cst_30 : f32 to vector<8x128xf32>
    %63 = arith.select %58, %62, %61 : vector<8x128xi1>, vector<8x128xf32>
    %cst_31 = arith.constant 1.000000e+00 : f32
    %64 = vector.broadcast %cst_31 : f32 to vector<8x128xf32>
    %65 = arith.cmpf ogt, %63, %64 : vector<8x128xf32>
    %66 = arith.extui %65 : vector<8x128xi1> to vector<8x128xi32>
    %67 = arith.sitofp %66 : vector<8x128xi32> to vector<8x128xf32>
    %68 = arith.index_cast %c1_i32 : i32 to index
    %c0_32 = arith.constant 0 : index
    %c0_33 = arith.constant 0 : index
    %69 = vector.load %arg5[%68, %c0_32, %c0_33] : memref<8x8x128xf32, #tpu.memory_space<vmem>>, vector<1x8x128xf32>
    %70 = vector.shape_cast %69 : vector<1x8x128xf32> to vector<8x128xf32>
    %71 = vector.shape_cast %67 : vector<8x128xf32> to vector<1x8x128xf32>
    tpu.vector_store %arg5[%68, %c0_32, %c0_33], %71 {strides = array<i32>} : memref<8x8x128xf32, #tpu.memory_space<vmem>>, vector<1x8x128xf32>,
    %cst_34 = arith.constant dense<0.000000e+00> : vector<8x128xf32>
    %72 = tpu.matmul %67, %1, %cst_34 {dimension_numbers = #tpu.dot_dimension_numbers<[1], [0], [0], [1], [0, 0, 1, 1], [], []>} : vector<8x128xf32>, vector<128x128xf32>, vector<8x128xf32> -> vector<8x128xf32>
    %73 = vector.broadcast %2 : vector<1x128xf32> to vector<8x128xf32>
    %74 = arith.addf %72, %73 : vector<8x128xf32>
    %cst_35 = arith.constant 0.949999988 : f32
    %75 = vector.broadcast %cst_35 : f32 to vector<8x128xf32>
    %76 = arith.mulf %75, %33 : vector<8x128xf32>
    %77 = arith.addf %76, %74 : vector<8x128xf32>
    %cst_36 = arith.constant 1.000000e+00 : f32
    %78 = vector.broadcast %cst_36 : f32 to vector<8x128xf32>
    %79 = arith.cmpf ogt, %40, %78 : vector<8x128xf32>
    %cst_37 = arith.constant 8.000000e-01 : f32
    %80 = vector.broadcast %cst_37 : f32 to vector<8x128xf32>
    %81 = arith.mulf %80, %40 : vector<8x128xf32>
    %82 = arith.addf %81, %77 : vector<8x128xf32>
    %cst_38 = arith.constant 0.000000e+00 : f32
    %83 = vector.broadcast %cst_38 : f32 to vector<8x128xf32>
    %84 = arith.select %79, %83, %82 : vector<8x128xi1>, vector<8x128xf32>
    %cst_39 = arith.constant 1.000000e+00 : f32
    %85 = vector.broadcast %cst_39 : f32 to vector<8x128xf32>
    %86 = arith.cmpf ogt, %84, %85 : vector<8x128xf32>
    %87 = arith.extui %86 : vector<8x128xi1> to vector<8x128xi32>
    %88 = arith.sitofp %87 : vector<8x128xi32> to vector<8x128xf32>
    %89 = arith.index_cast %c1_i32 : i32 to index
    %c0_40 = arith.constant 0 : index
    %c0_41 = arith.constant 0 : index
    %90 = vector.load %arg4[%89, %c0_40, %c0_41] : memref<8x8x128xf32, #tpu.memory_space<vmem>>, vector<1x8x128xf32>
    %91 = vector.shape_cast %90 : vector<1x8x128xf32> to vector<8x128xf32>
    %92 = vector.shape_cast %88 : vector<8x128xf32> to vector<1x8x128xf32>
    tpu.vector_store %arg4[%89, %c0_40, %c0_41], %92 {strides = array<i32>} : memref<8x8x128xf32, #tpu.memory_space<vmem>>, vector<1x8x128xf32>,
    %c2_i32 = arith.constant 2 : i32
    %cst_42 = arith.constant dense<0.000000e+00> : vector<8x128xf32>
    %93 = tpu.matmul %67, %0, %cst_42 {dimension_numbers = #tpu.dot_dimension_numbers<[1], [0], [0], [1], [0, 0, 1, 1], [], []>} : vector<8x128xf32>, vector<128x128xf32>, vector<8x128xf32> -> vector<8x128xf32>
    %cst_43 = arith.constant 0.899999976 : f32
    %94 = vector.broadcast %cst_43 : f32 to vector<8x128xf32>
    %95 = arith.mulf %94, %56 : vector<8x128xf32>
    %96 = arith.index_cast %c2_i32 : i32 to index
    %c0_44 = arith.constant 0 : index
    %c0_45 = arith.constant 0 : index
    %97 = vector.load %arg0[%96, %c0_44, %c0_45] : memref<8x8x128xf32, #tpu.memory_space<vmem>>, vector<1x8x128xf32>
    %98 = vector.shape_cast %97 : vector<1x8x128xf32> to vector<8x128xf32>
    %99 = arith.addf %95, %98 : vector<8x128xf32>
    %100 = arith.addf %99, %93 : vector<8x128xf32>
    %cst_46 = arith.constant 1.000000e+00 : f32
    %101 = vector.broadcast %cst_46 : f32 to vector<8x128xf32>
    %102 = arith.cmpf ogt, %63, %101 : vector<8x128xf32>
    %cst_47 = arith.constant 8.500000e-01 : f32
    %103 = vector.broadcast %cst_47 : f32 to vector<8x128xf32>
    %104 = arith.mulf %103, %63 : vector<8x128xf32>
    %105 = arith.addf %104, %100 : vector<8x128xf32>
    %cst_48 = arith.constant 0.000000e+00 : f32
    %106 = vector.broadcast %cst_48 : f32 to vector<8x128xf32>
    %107 = arith.select %102, %106, %105 : vector<8x128xi1>, vector<8x128xf32>
    %cst_49 = arith.constant 1.000000e+00 : f32
    %108 = vector.broadcast %cst_49 : f32 to vector<8x128xf32>
    %109 = arith.cmpf ogt, %107, %108 : vector<8x128xf32>
    %110 = arith.extui %109 : vector<8x128xi1> to vector<8x128xi32>
    %111 = arith.sitofp %110 : vector<8x128xi32> to vector<8x128xf32>
    %112 = arith.index_cast %c2_i32 : i32 to index
    %c0_50 = arith.constant 0 : index
    %c0_51 = arith.constant 0 : index
    %113 = vector.load %arg5[%112, %c0_50, %c0_51] : memref<8x8x128xf32, #tpu.memory_space<vmem>>, vector<1x8x128xf32>
    %114 = vector.shape_cast %113 : vector<1x8x128xf32> to vector<8x128xf32>
    %115 = vector.shape_cast %111 : vector<8x128xf32> to vector<1x8x128xf32>
    tpu.vector_store %arg5[%112, %c0_50, %c0_51], %115 {strides = array<i32>} : memref<8x8x128xf32, #tpu.memory_space<vmem>>, vector<1x8x128xf32>,
    %cst_52 = arith.constant dense<0.000000e+00> : vector<8x128xf32>
    %116 = tpu.matmul %111, %1, %cst_52 {dimension_numbers = #tpu.dot_dimension_numbers<[1], [0], [0], [1], [0, 0, 1, 1], [], []>} : vector<8x128xf32>, vector<128x128xf32>, vector<8x128xf32> -> vector<8x128xf32>
    %117 = vector.broadcast %2 : vector<1x128xf32> to vector<8x128xf32>
    %118 = arith.addf %116, %117 : vector<8x128xf32>
    %cst_53 = arith.constant 0.949999988 : f32
    %119 = vector.broadcast %cst_53 : f32 to vector<8x128xf32>
    %120 = arith.mulf %119, %77 : vector<8x128xf32>
    %121 = arith.addf %120, %118 : vector<8x128xf32>
    %cst_54 = arith.constant 1.000000e+00 : f32
    %122 = vector.broadcast %cst_54 : f32 to vector<8x128xf32>
    %123 = arith.cmpf ogt, %84, %122 : vector<8x128xf32>
    %cst_55 = arith.constant 8.000000e-01 : f32
    %124 = vector.broadcast %cst_55 : f32 to vector<8x128xf32>
    %125 = arith.mulf %124, %84 : vector<8x128xf32>
    %126 = arith.addf %125, %121 : vector<8x128xf32>
    %cst_56 = arith.constant 0.000000e+00 : f32
    %127 = vector.broadcast %cst_56 : f32 to vector<8x128xf32>
    %128 = arith.select %123, %127, %126 : vector<8x128xi1>, vector<8x128xf32>
    %cst_57 = arith.constant 1.000000e+00 : f32
    %129 = vector.broadcast %cst_57 : f32 to vector<8x128xf32>
    %130 = arith.cmpf ogt, %128, %129 : vector<8x128xf32>
    %131 = arith.extui %130 : vector<8x128xi1> to vector<8x128xi32>
    %132 = arith.sitofp %131 : vector<8x128xi32> to vector<8x128xf32>
    %133 = arith.index_cast %c2_i32 : i32 to index
    %c0_58 = arith.constant 0 : index
    %c0_59 = arith.constant 0 : index
    %134 = vector.load %arg4[%133, %c0_58, %c0_59] : memref<8x8x128xf32, #tpu.memory_space<vmem>>, vector<1x8x128xf32>
    %135 = vector.shape_cast %134 : vector<1x8x128xf32> to vector<8x128xf32>
    %136 = vector.shape_cast %132 : vector<8x128xf32> to vector<1x8x128xf32>
    tpu.vector_store %arg4[%133, %c0_58, %c0_59], %136 {strides = array<i32>} : memref<8x8x128xf32, #tpu.memory_space<vmem>>, vector<1x8x128xf32>,
    %c3_i32 = arith.constant 3 : i32
    %cst_60 = arith.constant dense<0.000000e+00> : vector<8x128xf32>
    %137 = tpu.matmul %111, %0, %cst_60 {dimension_numbers = #tpu.dot_dimension_numbers<[1], [0], [0], [1], [0, 0, 1, 1], [], []>} : vector<8x128xf32>, vector<128x128xf32>, vector<8x128xf32> -> vector<8x128xf32>
    %cst_61 = arith.constant 0.899999976 : f32
    %138 = vector.broadcast %cst_61 : f32 to vector<8x128xf32>
    %139 = arith.mulf %138, %100 : vector<8x128xf32>
    %140 = arith.index_cast %c3_i32 : i32 to index
    %c0_62 = arith.constant 0 : index
    %c0_63 = arith.constant 0 : index
    %141 = vector.load %arg0[%140, %c0_62, %c0_63] : memref<8x8x128xf32, #tpu.memory_space<vmem>>, vector<1x8x128xf32>
    %142 = vector.shape_cast %141 : vector<1x8x128xf32> to vector<8x128xf32>
    %143 = arith.addf %139, %142 : vector<8x128xf32>
    %144 = arith.addf %143, %137 : vector<8x128xf32>
    %cst_64 = arith.constant 1.000000e+00 : f32
    %145 = vector.broadcast %cst_64 : f32 to vector<8x128xf32>
    %146 = arith.cmpf ogt, %107, %145 : vector<8x128xf32>
    %cst_65 = arith.constant 8.500000e-01 : f32
    %147 = vector.broadcast %cst_65 : f32 to vector<8x128xf32>
    %148 = arith.mulf %147, %107 : vector<8x128xf32>
    %149 = arith.addf %148, %144 : vector<8x128xf32>
    %cst_66 = arith.constant 0.000000e+00 : f32
    %150 = vector.broadcast %cst_66 : f32 to vector<8x128xf32>
    %151 = arith.select %146, %150, %149 : vector<8x128xi1>, vector<8x128xf32>
    %cst_67 = arith.constant 1.000000e+00 : f32
    %152 = vector.broadcast %cst_67 : f32 to vector<8x128xf32>
    %153 = arith.cmpf ogt, %151, %152 : vector<8x128xf32>
    %154 = arith.extui %153 : vector<8x128xi1> to vector<8x128xi32>
    %155 = arith.sitofp %154 : vector<8x128xi32> to vector<8x128xf32>
    %156 = arith.index_cast %c3_i32 : i32 to index
    %c0_68 = arith.constant 0 : index
    %c0_69 = arith.constant 0 : index
    %157 = vector.load %arg5[%156, %c0_68, %c0_69] : memref<8x8x128xf32, #tpu.memory_space<vmem>>, vector<1x8x128xf32>
    %158 = vector.shape_cast %157 : vector<1x8x128xf32> to vector<8x128xf32>
    %159 = vector.shape_cast %155 : vector<8x128xf32> to vector<1x8x128xf32>
    tpu.vector_store %arg5[%156, %c0_68, %c0_69], %159 {strides = array<i32>} : memref<8x8x128xf32, #tpu.memory_space<vmem>>, vector<1x8x128xf32>,
    %cst_70 = arith.constant dense<0.000000e+00> : vector<8x128xf32>
    %160 = tpu.matmul %155, %1, %cst_70 {dimension_numbers = #tpu.dot_dimension_numbers<[1], [0], [0], [1], [0, 0, 1, 1], [], []>} : vector<8x128xf32>, vector<128x128xf32>, vector<8x128xf32> -> vector<8x128xf32>
    %161 = vector.broadcast %2 : vector<1x128xf32> to vector<8x128xf32>
    %162 = arith.addf %160, %161 : vector<8x128xf32>
    %cst_71 = arith.constant 0.949999988 : f32
    %163 = vector.broadcast %cst_71 : f32 to vector<8x128xf32>
    %164 = arith.mulf %163, %121 : vector<8x128xf32>
    %165 = arith.addf %164, %162 : vector<8x128xf32>
    %cst_72 = arith.constant 1.000000e+00 : f32
    %166 = vector.broadcast %cst_72 : f32 to vector<8x128xf32>
    %167 = arith.cmpf ogt, %128, %166 : vector<8x128xf32>
    %cst_73 = arith.constant 8.000000e-01 : f32
    %168 = vector.broadcast %cst_73 : f32 to vector<8x128xf32>
    %169 = arith.mulf %168, %128 : vector<8x128xf32>
    %170 = arith.addf %169, %165 : vector<8x128xf32>
    %cst_74 = arith.constant 0.000000e+00 : f32
    %171 = vector.broadcast %cst_74 : f32 to vector<8x128xf32>
    %172 = arith.select %167, %171, %170 : vector<8x128xi1>, vector<8x128xf32>
    %cst_75 = arith.constant 1.000000e+00 : f32
    %173 = vector.broadcast %cst_75 : f32 to vector<8x128xf32>
    %174 = arith.cmpf ogt, %172, %173 : vector<8x128xf32>
    %175 = arith.extui %174 : vector<8x128xi1> to vector<8x128xi32>
    %176 = arith.sitofp %175 : vector<8x128xi32> to vector<8x128xf32>
    %177 = arith.index_cast %c3_i32 : i32 to index
    %c0_76 = arith.constant 0 : index
    %c0_77 = arith.constant 0 : index
    %178 = vector.load %arg4[%177, %c0_76, %c0_77] : memref<8x8x128xf32, #tpu.memory_space<vmem>>, vector<1x8x128xf32>
    %179 = vector.shape_cast %178 : vector<1x8x128xf32> to vector<8x128xf32>
    %180 = vector.shape_cast %176 : vector<8x128xf32> to vector<1x8x128xf32>
    tpu.vector_store %arg4[%177, %c0_76, %c0_77], %180 {strides = array<i32>} : memref<8x8x128xf32, #tpu.memory_space<vmem>>, vector<1x8x128xf32>,
    %c4_i32 = arith.constant 4 : i32
    %cst_78 = arith.constant dense<0.000000e+00> : vector<8x128xf32>
    %181 = tpu.matmul %155, %0, %cst_78 {dimension_numbers = #tpu.dot_dimension_numbers<[1], [0], [0], [1], [0, 0, 1, 1], [], []>} : vector<8x128xf32>, vector<128x128xf32>, vector<8x128xf32> -> vector<8x128xf32>
    %cst_79 = arith.constant 0.899999976 : f32
    %182 = vector.broadcast %cst_79 : f32 to vector<8x128xf32>
    %183 = arith.mulf %182, %144 : vector<8x128xf32>
    %184 = arith.index_cast %c4_i32 : i32 to index
    %c0_80 = arith.constant 0 : index
    %c0_81 = arith.constant 0 : index
    %185 = vector.load %arg0[%184, %c0_80, %c0_81] : memref<8x8x128xf32, #tpu.memory_space<vmem>>, vector<1x8x128xf32>
    %186 = vector.shape_cast %185 : vector<1x8x128xf32> to vector<8x128xf32>
    %187 = arith.addf %183, %186 : vector<8x128xf32>
    %188 = arith.addf %187, %181 : vector<8x128xf32>
    %cst_82 = arith.constant 1.000000e+00 : f32
    %189 = vector.broadcast %cst_82 : f32 to vector<8x128xf32>
    %190 = arith.cmpf ogt, %151, %189 : vector<8x128xf32>
    %cst_83 = arith.constant 8.500000e-01 : f32
    %191 = vector.broadcast %cst_83 : f32 to vector<8x128xf32>
    %192 = arith.mulf %191, %151 : vector<8x128xf32>
    %193 = arith.addf %192, %188 : vector<8x128xf32>
    %cst_84 = arith.constant 0.000000e+00 : f32
    %194 = vector.broadcast %cst_84 : f32 to vector<8x128xf32>
    %195 = arith.select %190, %194, %193 : vector<8x128xi1>, vector<8x128xf32>
    %cst_85 = arith.constant 1.000000e+00 : f32
    %196 = vector.broadcast %cst_85 : f32 to vector<8x128xf32>
    %197 = arith.cmpf ogt, %195, %196 : vector<8x128xf32>
    %198 = arith.extui %197 : vector<8x128xi1> to vector<8x128xi32>
    %199 = arith.sitofp %198 : vector<8x128xi32> to vector<8x128xf32>
    %200 = arith.index_cast %c4_i32 : i32 to index
    %c0_86 = arith.constant 0 : index
    %c0_87 = arith.constant 0 : index
    %201 = vector.load %arg5[%200, %c0_86, %c0_87] : memref<8x8x128xf32, #tpu.memory_space<vmem>>, vector<1x8x128xf32>
    %202 = vector.shape_cast %201 : vector<1x8x128xf32> to vector<8x128xf32>
    %203 = vector.shape_cast %199 : vector<8x128xf32> to vector<1x8x128xf32>
    tpu.vector_store %arg5[%200, %c0_86, %c0_87], %203 {strides = array<i32>} : memref<8x8x128xf32, #tpu.memory_space<vmem>>, vector<1x8x128xf32>,
    %cst_88 = arith.constant dense<0.000000e+00> : vector<8x128xf32>
    %204 = tpu.matmul %199, %1, %cst_88 {dimension_numbers = #tpu.dot_dimension_numbers<[1], [0], [0], [1], [0, 0, 1, 1], [], []>} : vector<8x128xf32>, vector<128x128xf32>, vector<8x128xf32> -> vector<8x128xf32>
    %205 = vector.broadcast %2 : vector<1x128xf32> to vector<8x128xf32>
    %206 = arith.addf %204, %205 : vector<8x128xf32>
    %cst_89 = arith.constant 0.949999988 : f32
    %207 = vector.broadcast %cst_89 : f32 to vector<8x128xf32>
    %208 = arith.mulf %207, %165 : vector<8x128xf32>
    %209 = arith.addf %208, %206 : vector<8x128xf32>
    %cst_90 = arith.constant 1.000000e+00 : f32
    %210 = vector.broadcast %cst_90 : f32 to vector<8x128xf32>
    %211 = arith.cmpf ogt, %172, %210 : vector<8x128xf32>
    %cst_91 = arith.constant 8.000000e-01 : f32
    %212 = vector.broadcast %cst_91 : f32 to vector<8x128xf32>
    %213 = arith.mulf %212, %172 : vector<8x128xf32>
    %214 = arith.addf %213, %209 : vector<8x128xf32>
    %cst_92 = arith.constant 0.000000e+00 : f32
    %215 = vector.broadcast %cst_92 : f32 to vector<8x128xf32>
    %216 = arith.select %211, %215, %214 : vector<8x128xi1>, vector<8x128xf32>
    %cst_93 = arith.constant 1.000000e+00 : f32
    %217 = vector.broadcast %cst_93 : f32 to vector<8x128xf32>
    %218 = arith.cmpf ogt, %216, %217 : vector<8x128xf32>
    %219 = arith.extui %218 : vector<8x128xi1> to vector<8x128xi32>
    %220 = arith.sitofp %219 : vector<8x128xi32> to vector<8x128xf32>
    %221 = arith.index_cast %c4_i32 : i32 to index
    %c0_94 = arith.constant 0 : index
    %c0_95 = arith.constant 0 : index
    %222 = vector.load %arg4[%221, %c0_94, %c0_95] : memref<8x8x128xf32, #tpu.memory_space<vmem>>, vector<1x8x128xf32>
    %223 = vector.shape_cast %222 : vector<1x8x128xf32> to vector<8x128xf32>
    %224 = vector.shape_cast %220 : vector<8x128xf32> to vector<1x8x128xf32>
    tpu.vector_store %arg4[%221, %c0_94, %c0_95], %224 {strides = array<i32>} : memref<8x8x128xf32, #tpu.memory_space<vmem>>, vector<1x8x128xf32>,
    %c5_i32 = arith.constant 5 : i32
    %cst_96 = arith.constant dense<0.000000e+00> : vector<8x128xf32>
    %225 = tpu.matmul %199, %0, %cst_96 {dimension_numbers = #tpu.dot_dimension_numbers<[1], [0], [0], [1], [0, 0, 1, 1], [], []>} : vector<8x128xf32>, vector<128x128xf32>, vector<8x128xf32> -> vector<8x128xf32>
    %cst_97 = arith.constant 0.899999976 : f32
    %226 = vector.broadcast %cst_97 : f32 to vector<8x128xf32>
    %227 = arith.mulf %226, %188 : vector<8x128xf32>
    %228 = arith.index_cast %c5_i32 : i32 to index
    %c0_98 = arith.constant 0 : index
    %c0_99 = arith.constant 0 : index
    %229 = vector.load %arg0[%228, %c0_98, %c0_99] : memref<8x8x128xf32, #tpu.memory_space<vmem>>, vector<1x8x128xf32>
    %230 = vector.shape_cast %229 : vector<1x8x128xf32> to vector<8x128xf32>
    %231 = arith.addf %227, %230 : vector<8x128xf32>
    %232 = arith.addf %231, %225 : vector<8x128xf32>
    %cst_100 = arith.constant 1.000000e+00 : f32
    %233 = vector.broadcast %cst_100 : f32 to vector<8x128xf32>
    %234 = arith.cmpf ogt, %195, %233 : vector<8x128xf32>
    %cst_101 = arith.constant 8.500000e-01 : f32
    %235 = vector.broadcast %cst_101 : f32 to vector<8x128xf32>
    %236 = arith.mulf %235, %195 : vector<8x128xf32>
    %237 = arith.addf %236, %232 : vector<8x128xf32>
    %cst_102 = arith.constant 0.000000e+00 : f32
    %238 = vector.broadcast %cst_102 : f32 to vector<8x128xf32>
    %239 = arith.select %234, %238, %237 : vector<8x128xi1>, vector<8x128xf32>
    %cst_103 = arith.constant 1.000000e+00 : f32
    %240 = vector.broadcast %cst_103 : f32 to vector<8x128xf32>
    %241 = arith.cmpf ogt, %239, %240 : vector<8x128xf32>
    %242 = arith.extui %241 : vector<8x128xi1> to vector<8x128xi32>
    %243 = arith.sitofp %242 : vector<8x128xi32> to vector<8x128xf32>
    %244 = arith.index_cast %c5_i32 : i32 to index
    %c0_104 = arith.constant 0 : index
    %c0_105 = arith.constant 0 : index
    %245 = vector.load %arg5[%244, %c0_104, %c0_105] : memref<8x8x128xf32, #tpu.memory_space<vmem>>, vector<1x8x128xf32>
    %246 = vector.shape_cast %245 : vector<1x8x128xf32> to vector<8x128xf32>
    %247 = vector.shape_cast %243 : vector<8x128xf32> to vector<1x8x128xf32>
    tpu.vector_store %arg5[%244, %c0_104, %c0_105], %247 {strides = array<i32>} : memref<8x8x128xf32, #tpu.memory_space<vmem>>, vector<1x8x128xf32>,
    %cst_106 = arith.constant dense<0.000000e+00> : vector<8x128xf32>
    %248 = tpu.matmul %243, %1, %cst_106 {dimension_numbers = #tpu.dot_dimension_numbers<[1], [0], [0], [1], [0, 0, 1, 1], [], []>} : vector<8x128xf32>, vector<128x128xf32>, vector<8x128xf32> -> vector<8x128xf32>
    %249 = vector.broadcast %2 : vector<1x128xf32> to vector<8x128xf32>
    %250 = arith.addf %248, %249 : vector<8x128xf32>
    %cst_107 = arith.constant 0.949999988 : f32
    %251 = vector.broadcast %cst_107 : f32 to vector<8x128xf32>
    %252 = arith.mulf %251, %209 : vector<8x128xf32>
    %253 = arith.addf %252, %250 : vector<8x128xf32>
    %cst_108 = arith.constant 1.000000e+00 : f32
    %254 = vector.broadcast %cst_108 : f32 to vector<8x128xf32>
    %255 = arith.cmpf ogt, %216, %254 : vector<8x128xf32>
    %cst_109 = arith.constant 8.000000e-01 : f32
    %256 = vector.broadcast %cst_109 : f32 to vector<8x128xf32>
    %257 = arith.mulf %256, %216 : vector<8x128xf32>
    %258 = arith.addf %257, %253 : vector<8x128xf32>
    %cst_110 = arith.constant 0.000000e+00 : f32
    %259 = vector.broadcast %cst_110 : f32 to vector<8x128xf32>
    %260 = arith.select %255, %259, %258 : vector<8x128xi1>, vector<8x128xf32>
    %cst_111 = arith.constant 1.000000e+00 : f32
    %261 = vector.broadcast %cst_111 : f32 to vector<8x128xf32>
    %262 = arith.cmpf ogt, %260, %261 : vector<8x128xf32>
    %263 = arith.extui %262 : vector<8x128xi1> to vector<8x128xi32>
    %264 = arith.sitofp %263 : vector<8x128xi32> to vector<8x128xf32>
    %265 = arith.index_cast %c5_i32 : i32 to index
    %c0_112 = arith.constant 0 : index
    %c0_113 = arith.constant 0 : index
    %266 = vector.load %arg4[%265, %c0_112, %c0_113] : memref<8x8x128xf32, #tpu.memory_space<vmem>>, vector<1x8x128xf32>
    %267 = vector.shape_cast %266 : vector<1x8x128xf32> to vector<8x128xf32>
    %268 = vector.shape_cast %264 : vector<8x128xf32> to vector<1x8x128xf32>
    tpu.vector_store %arg4[%265, %c0_112, %c0_113], %268 {strides = array<i32>} : memref<8x8x128xf32, #tpu.memory_space<vmem>>, vector<1x8x128xf32>,
    %c6_i32 = arith.constant 6 : i32
    %cst_114 = arith.constant dense<0.000000e+00> : vector<8x128xf32>
    %269 = tpu.matmul %243, %0, %cst_114 {dimension_numbers = #tpu.dot_dimension_numbers<[1], [0], [0], [1], [0, 0, 1, 1], [], []>} : vector<8x128xf32>, vector<128x128xf32>, vector<8x128xf32> -> vector<8x128xf32>
    %cst_115 = arith.constant 0.899999976 : f32
    %270 = vector.broadcast %cst_115 : f32 to vector<8x128xf32>
    %271 = arith.mulf %270, %232 : vector<8x128xf32>
    %272 = arith.index_cast %c6_i32 : i32 to index
    %c0_116 = arith.constant 0 : index
    %c0_117 = arith.constant 0 : index
    %273 = vector.load %arg0[%272, %c0_116, %c0_117] : memref<8x8x128xf32, #tpu.memory_space<vmem>>, vector<1x8x128xf32>
    %274 = vector.shape_cast %273 : vector<1x8x128xf32> to vector<8x128xf32>
    %275 = arith.addf %271, %274 : vector<8x128xf32>
    %276 = arith.addf %275, %269 : vector<8x128xf32>
    %cst_118 = arith.constant 1.000000e+00 : f32
    %277 = vector.broadcast %cst_118 : f32 to vector<8x128xf32>
    %278 = arith.cmpf ogt, %239, %277 : vector<8x128xf32>
    %cst_119 = arith.constant 8.500000e-01 : f32
    %279 = vector.broadcast %cst_119 : f32 to vector<8x128xf32>
    %280 = arith.mulf %279, %239 : vector<8x128xf32>
    %281 = arith.addf %280, %276 : vector<8x128xf32>
    %cst_120 = arith.constant 0.000000e+00 : f32
    %282 = vector.broadcast %cst_120 : f32 to vector<8x128xf32>
    %283 = arith.select %278, %282, %281 : vector<8x128xi1>, vector<8x128xf32>
    %cst_121 = arith.constant 1.000000e+00 : f32
    %284 = vector.broadcast %cst_121 : f32 to vector<8x128xf32>
    %285 = arith.cmpf ogt, %283, %284 : vector<8x128xf32>
    %286 = arith.extui %285 : vector<8x128xi1> to vector<8x128xi32>
    %287 = arith.sitofp %286 : vector<8x128xi32> to vector<8x128xf32>
    %288 = arith.index_cast %c6_i32 : i32 to index
    %c0_122 = arith.constant 0 : index
    %c0_123 = arith.constant 0 : index
    %289 = vector.load %arg5[%288, %c0_122, %c0_123] : memref<8x8x128xf32, #tpu.memory_space<vmem>>, vector<1x8x128xf32>
    %290 = vector.shape_cast %289 : vector<1x8x128xf32> to vector<8x128xf32>
    %291 = vector.shape_cast %287 : vector<8x128xf32> to vector<1x8x128xf32>
    tpu.vector_store %arg5[%288, %c0_122, %c0_123], %291 {strides = array<i32>} : memref<8x8x128xf32, #tpu.memory_space<vmem>>, vector<1x8x128xf32>,
    %cst_124 = arith.constant dense<0.000000e+00> : vector<8x128xf32>
    %292 = tpu.matmul %287, %1, %cst_124 {dimension_numbers = #tpu.dot_dimension_numbers<[1], [0], [0], [1], [0, 0, 1, 1], [], []>} : vector<8x128xf32>, vector<128x128xf32>, vector<8x128xf32> -> vector<8x128xf32>
    %293 = vector.broadcast %2 : vector<1x128xf32> to vector<8x128xf32>
    %294 = arith.addf %292, %293 : vector<8x128xf32>
    %cst_125 = arith.constant 0.949999988 : f32
    %295 = vector.broadcast %cst_125 : f32 to vector<8x128xf32>
    %296 = arith.mulf %295, %253 : vector<8x128xf32>
    %297 = arith.addf %296, %294 : vector<8x128xf32>
    %cst_126 = arith.constant 1.000000e+00 : f32
    %298 = vector.broadcast %cst_126 : f32 to vector<8x128xf32>
    %299 = arith.cmpf ogt, %260, %298 : vector<8x128xf32>
    %cst_127 = arith.constant 8.000000e-01 : f32
    %300 = vector.broadcast %cst_127 : f32 to vector<8x128xf32>
    %301 = arith.mulf %300, %260 : vector<8x128xf32>
    %302 = arith.addf %301, %297 : vector<8x128xf32>
    %cst_128 = arith.constant 0.000000e+00 : f32
    %303 = vector.broadcast %cst_128 : f32 to vector<8x128xf32>
    %304 = arith.select %299, %303, %302 : vector<8x128xi1>, vector<8x128xf32>
    %cst_129 = arith.constant 1.000000e+00 : f32
    %305 = vector.broadcast %cst_129 : f32 to vector<8x128xf32>
    %306 = arith.cmpf ogt, %304, %305 : vector<8x128xf32>
    %307 = arith.extui %306 : vector<8x128xi1> to vector<8x128xi32>
    %308 = arith.sitofp %307 : vector<8x128xi32> to vector<8x128xf32>
    %309 = arith.index_cast %c6_i32 : i32 to index
    %c0_130 = arith.constant 0 : index
    %c0_131 = arith.constant 0 : index
    %310 = vector.load %arg4[%309, %c0_130, %c0_131] : memref<8x8x128xf32, #tpu.memory_space<vmem>>, vector<1x8x128xf32>
    %311 = vector.shape_cast %310 : vector<1x8x128xf32> to vector<8x128xf32>
    %312 = vector.shape_cast %308 : vector<8x128xf32> to vector<1x8x128xf32>
    tpu.vector_store %arg4[%309, %c0_130, %c0_131], %312 {strides = array<i32>} : memref<8x8x128xf32, #tpu.memory_space<vmem>>, vector<1x8x128xf32>,
    %c7_i32 = arith.constant 7 : i32
    %cst_132 = arith.constant dense<0.000000e+00> : vector<8x128xf32>
    %313 = tpu.matmul %287, %0, %cst_132 {dimension_numbers = #tpu.dot_dimension_numbers<[1], [0], [0], [1], [0, 0, 1, 1], [], []>} : vector<8x128xf32>, vector<128x128xf32>, vector<8x128xf32> -> vector<8x128xf32>
    %cst_133 = arith.constant 0.899999976 : f32
    %314 = vector.broadcast %cst_133 : f32 to vector<8x128xf32>
    %315 = arith.mulf %314, %276 : vector<8x128xf32>
    %316 = arith.index_cast %c7_i32 : i32 to index
    %c0_134 = arith.constant 0 : index
    %c0_135 = arith.constant 0 : index
    %317 = vector.load %arg0[%316, %c0_134, %c0_135] : memref<8x8x128xf32, #tpu.memory_space<vmem>>, vector<1x8x128xf32>
    %318 = vector.shape_cast %317 : vector<1x8x128xf32> to vector<8x128xf32>
    %319 = arith.addf %315, %318 : vector<8x128xf32>
    %320 = arith.addf %319, %313 : vector<8x128xf32>
    %cst_136 = arith.constant 1.000000e+00 : f32
    %321 = vector.broadcast %cst_136 : f32 to vector<8x128xf32>
    %322 = arith.cmpf ogt, %283, %321 : vector<8x128xf32>
    %cst_137 = arith.constant 8.500000e-01 : f32
    %323 = vector.broadcast %cst_137 : f32 to vector<8x128xf32>
    %324 = arith.mulf %323, %283 : vector<8x128xf32>
    %325 = arith.addf %324, %320 : vector<8x128xf32>
    %cst_138 = arith.constant 0.000000e+00 : f32
    %326 = vector.broadcast %cst_138 : f32 to vector<8x128xf32>
    %327 = arith.select %322, %326, %325 : vector<8x128xi1>, vector<8x128xf32>
    %cst_139 = arith.constant 1.000000e+00 : f32
    %328 = vector.broadcast %cst_139 : f32 to vector<8x128xf32>
    %329 = arith.cmpf ogt, %327, %328 : vector<8x128xf32>
    %330 = arith.extui %329 : vector<8x128xi1> to vector<8x128xi32>
    %331 = arith.sitofp %330 : vector<8x128xi32> to vector<8x128xf32>
    %332 = arith.index_cast %c7_i32 : i32 to index
    %c0_140 = arith.constant 0 : index
    %c0_141 = arith.constant 0 : index
    %333 = vector.load %arg5[%332, %c0_140, %c0_141] : memref<8x8x128xf32, #tpu.memory_space<vmem>>, vector<1x8x128xf32>
    %334 = vector.shape_cast %333 : vector<1x8x128xf32> to vector<8x128xf32>
    %335 = vector.shape_cast %331 : vector<8x128xf32> to vector<1x8x128xf32>
    tpu.vector_store %arg5[%332, %c0_140, %c0_141], %335 {strides = array<i32>} : memref<8x8x128xf32, #tpu.memory_space<vmem>>, vector<1x8x128xf32>,
    %cst_142 = arith.constant dense<0.000000e+00> : vector<8x128xf32>
    %336 = tpu.matmul %331, %1, %cst_142 {dimension_numbers = #tpu.dot_dimension_numbers<[1], [0], [0], [1], [0, 0, 1, 1], [], []>} : vector<8x128xf32>, vector<128x128xf32>, vector<8x128xf32> -> vector<8x128xf32>
    %337 = vector.broadcast %2 : vector<1x128xf32> to vector<8x128xf32>
    %338 = arith.addf %336, %337 : vector<8x128xf32>
    %cst_143 = arith.constant 0.949999988 : f32
    %339 = vector.broadcast %cst_143 : f32 to vector<8x128xf32>
    %340 = arith.mulf %339, %297 : vector<8x128xf32>
    %341 = arith.addf %340, %338 : vector<8x128xf32>
    %cst_144 = arith.constant 1.000000e+00 : f32
    %342 = vector.broadcast %cst_144 : f32 to vector<8x128xf32>
    %343 = arith.cmpf ogt, %304, %342 : vector<8x128xf32>
    %cst_145 = arith.constant 8.000000e-01 : f32
    %344 = vector.broadcast %cst_145 : f32 to vector<8x128xf32>
    %345 = arith.mulf %344, %304 : vector<8x128xf32>
    %346 = arith.addf %345, %341 : vector<8x128xf32>
    %cst_146 = arith.constant 0.000000e+00 : f32
    %347 = vector.broadcast %cst_146 : f32 to vector<8x128xf32>
    %348 = arith.select %343, %347, %346 : vector<8x128xi1>, vector<8x128xf32>
    %cst_147 = arith.constant 1.000000e+00 : f32
    %349 = vector.broadcast %cst_147 : f32 to vector<8x128xf32>
    %350 = arith.cmpf ogt, %348, %349 : vector<8x128xf32>
    %351 = arith.extui %350 : vector<8x128xi1> to vector<8x128xi32>
    %352 = arith.sitofp %351 : vector<8x128xi32> to vector<8x128xf32>
    %353 = arith.index_cast %c7_i32 : i32 to index
    %c0_148 = arith.constant 0 : index
    %c0_149 = arith.constant 0 : index
    %354 = vector.load %arg4[%353, %c0_148, %c0_149] : memref<8x8x128xf32, #tpu.memory_space<vmem>>, vector<1x8x128xf32>
    %355 = vector.shape_cast %354 : vector<1x8x128xf32> to vector<8x128xf32>
    %356 = vector.shape_cast %352 : vector<8x128xf32> to vector<1x8x128xf32>
    tpu.vector_store %arg4[%353, %c0_148, %c0_149], %356 {strides = array<i32>} : memref<8x8x128xf32, #tpu.memory_space<vmem>>, vector<1x8x128xf32>,
    %c8_i32 = arith.constant 8 : i32
    return
  }
}

</mosaic_0001>

<llo_original>
// kernel: tpu_custom_call.1
$region0: #{tpu_custom_call.1}
  #allocation0 [shape = 'u32[]', space=smem, size = 0x4, offset = 0x4, fixed_abs, tag = 'smem constant byte address 0x4 - core index']
  #allocation1 [shape = 'u32[144,128]{1,0:T(1,128)}', space=vmem, size = 0x12000, scoped, tag = 'internal scratch']
  %s0 = inlined_call_operand.hbm [shape: f32[8,8,128], index: 0, kind: input, shape index: {}]
  %s1 = inlined_call_operand.hbm [shape: f32[128,128], index: 1, kind: input, shape index: {}]
  %s2 = inlined_call_operand.hbm [shape: f32[128,128], index: 2, kind: input, shape index: {}]
  %s3 = inlined_call_operand.vmem [shape: f32[1,128], index: 3, kind: input, shape index: {}]
  %s4 = inlined_call_operand.hbm [shape: f32[8,8,128], index: 4, kind: output, shape index: {0}]
  %s5 = inlined_call_operand.hbm [shape: f32[8,8,128], index: 5, kind: output, shape index: {1}]
  %6 = xla_tuple %s4, %s5
  %s7 = sld [smem:[#allocation0]]
  $region46: #{tpu_custom_call.1} parent=0
    _
  %s9 = ssub.s32 1, %s7
  %s10 = scalar_select 0, %s9, %s7
  $region1: #{tpu_custom_call.1} parent=0
    #allocation2 [shape = 'u8[32768]{0}', space=vmem, size = 0x8000, scoped, tag = 'input window, operand 0, single buffered']
    #allocation3 [shape = 's32[1]{0}', space=sflag, size = 0x4, scoped, tag = 'scoped memory for tpu_custom_call.1']
    #allocation4 [shape = 's32[1]{0}', space=sflag, size = 0x4, scoped, tag = 'scoped memory for tpu_custom_call.1']
    #allocation5 [shape = 'u8[65536]{0}', space=vmem, size = 0x10000, scoped, tag = 'input window, operand 1, single buffered']
    #allocation6 [shape = 's32[1]{0}', space=sflag, size = 0x4, scoped, tag = 'scoped memory for tpu_custom_call.1']
    #allocation7 [shape = 'u8[65536]{0}', space=vmem, size = 0x10000, scoped, tag = 'input window, operand 2, single buffered']
    #allocation8 [shape = 'u8[32768]{0}', space=vmem, size = 0x8000, scoped, tag = 'output window, operand 0, single buffered']
    #allocation9 [shape = 'u8[32768]{0}', space=vmem, size = 0x8000, scoped, tag = 'output window, operand 1, single buffered']
    #allocation10 [shape = 's32[1]{0}', space=sflag, size = 0x4, scoped, tag = 'scoped memory for tpu_custom_call.1']
    %11 = vsyncpa [#allocation3], 0
    %12 = vsyncpa [#allocation6], 0
    %13 = vsyncpa [#allocation4], 0
    %14 = vsyncpa [#allocation10], 0
    // Predicated region
    $region2: #{tpu_custom_call.1} parent=1 // pred_check
      _
    $region3: #{tpu_custom_call.1} parent=1 // pred_check_branch
      %16 = sbr.rel (0) target = $region5
    $region4: #{tpu_custom_call.1} parent=1 // pred_region
      %s18 = ssub.s32 1024, 1024
      %19 = vsyncadd [#allocation3], %s18
      %s20 = sshll.u32 [#allocation2], 4
      %s21 = int_to_ptr.vmem [resolvable:$true] %s20
      %26 = dma.hbm_to_vmem [thread:$0]  %s0, 1024, %s21, [#allocation3], 128, 128, 8
    $region5: #{tpu_custom_call.1} parent=1 // pred_fallthru
      _
    // Predicated region
    $region6: #{tpu_custom_call.1} parent=1 // pred_check
      _
    $region7: #{tpu_custom_call.1} parent=1 // pred_check_branch
      %28 = sbr.rel (0) target = $region9
    $region8: #{tpu_custom_call.1} parent=1 // pred_region
      %s30 = ssub.s32 2048, 2048
      %31 = vsyncadd [#allocation6], %s30
      %s32 = sshll.u32 [#allocation5], 4
      %s33 = int_to_ptr.vmem [resolvable:$true] %s32
      %38 = dma.hbm_to_vmem [thread:$0]  %s1, 2048, %s33, [#allocation6], 128, 128, 8
    $region9: #{tpu_custom_call.1} parent=1 // pred_fallthru
      _
    // Predicated region
    $region10: #{tpu_custom_call.1} parent=1 // pred_check
      _
    $region11: #{tpu_custom_call.1} parent=1 // pred_check_branch
      %40 = sbr.rel (0) target = $region13
    $region12: #{tpu_custom_call.1} parent=1 // pred_region
      %s42 = ssub.s32 2048, 2048
      %43 = vsyncadd [#allocation6], %s42
      %s44 = sshll.u32 [#allocation7], 4
      %s45 = int_to_ptr.vmem [resolvable:$true] %s44
      %50 = dma.hbm_to_vmem [thread:$0]  %s2, 2048, %s45, [#allocation6], 128, 128, 8
    $region13: #{tpu_custom_call.1} parent=1 // pred_fallthru
      _
    // Predicated region
    $region14: #{tpu_custom_call.1} parent=1 // pred_check
      _
    $region15: #{tpu_custom_call.1} parent=1 // pred_check_branch
      %52 = sbr.rel (0) target = $region17
    $region16: #{tpu_custom_call.1} parent=1 // pred_region
      _
    $region17: #{tpu_custom_call.1} parent=1 // pred_fallthru
      _
    // Predicated region
    $region18: #{tpu_custom_call.1} parent=1 // pred_check
      _
    $region19: #{tpu_custom_call.1} parent=1 // pred_check_branch
      %54 = sbr.rel (0) target = $region21
    $region20: #{tpu_custom_call.1} parent=1 // pred_region
      %55 = dma.done [#allocation3], 1024
    $region21: #{tpu_custom_call.1} parent=1 // pred_fallthru
      _
    // Predicated region
    $region22: #{tpu_custom_call.1} parent=1 // pred_check
      _
    $region23: #{tpu_custom_call.1} parent=1 // pred_check_branch
      %57 = sbr.rel (0) target = $region25
    $region24: #{tpu_custom_call.1} parent=1 // pred_region
      %58 = dma.done [#allocation6], 2048
    $region25: #{tpu_custom_call.1} parent=1 // pred_fallthru
      _
    // Predicated region
    $region26: #{tpu_custom_call.1} parent=1 // pred_check
      _
    $region27: #{tpu_custom_call.1} parent=1 // pred_check_branch
      %60 = sbr.rel (0) target = $region29
    $region28: #{tpu_custom_call.1} parent=1 // pred_region
      %61 = dma.done [#allocation6], 2048
    $region29: #{tpu_custom_call.1} parent=1 // pred_fallthru
      _
    %v62 = vld [vmem:[#allocation5] sm:$0xff]
    %v63 = vld [vmem:[#allocation5 + $0x8] sm:$0xff]
    %v64 = vld [vmem:[#allocation5 + $0x10] sm:$0xff]
    %v65 = vld [vmem:[#allocation5 + $0x18] sm:$0xff]
    %v66 = vld [vmem:[#allocation5 + $0x20] sm:$0xff]
    %v67 = vld [vmem:[#allocation5 + $0x28] sm:$0xff]
    %v68 = vld [vmem:[#allocation5 + $0x30] sm:$0xff]
    %v69 = vld [vmem:[#allocation5 + $0x38] sm:$0xff]
    %v70 = vld [vmem:[#allocation5 + $0x40] sm:$0xff]
    %v71 = vld [vmem:[#allocation5 + $0x48] sm:$0xff]
    %v72 = vld [vmem:[#allocation5 + $0x50] sm:$0xff]
    %v73 = vld [vmem:[#allocation5 + $0x58] sm:$0xff]
    %v74 = vld [vmem:[#allocation5 + $0x60] sm:$0xff]
    %v75 = vld [vmem:[#allocation5 + $0x68] sm:$0xff]
    %v76 = vld [vmem:[#allocation5 + $0x70] sm:$0xff]
    %v77 = vld [vmem:[#allocation5 + $0x78] sm:$0xff]
    %v78 = vld [vmem:[#allocation7] sm:$0xff]
    %v79 = vld [vmem:[#allocation7 + $0x8] sm:$0xff]
    %v80 = vld [vmem:[#allocation7 + $0x10] sm:$0xff]
    %v81 = vld [vmem:[#allocation7 + $0x18] sm:$0xff]
    %v82 = vld [vmem:[#allocation7 + $0x20] sm:$0xff]
    %v83 = vld [vmem:[#allocation7 + $0x28] sm:$0xff]
    %v84 = vld [vmem:[#allocation7 + $0x30] sm:$0xff]
    %v85 = vld [vmem:[#allocation7 + $0x38] sm:$0xff]
    %v86 = vld [vmem:[#allocation7 + $0x40] sm:$0xff]
    %v87 = vld [vmem:[#allocation7 + $0x48] sm:$0xff]
    %v88 = vld [vmem:[#allocation7 + $0x50] sm:$0xff]
    %v89 = vld [vmem:[#allocation7 + $0x58] sm:$0xff]
    %v90 = vld [vmem:[#allocation7 + $0x60] sm:$0xff]
    %v91 = vld [vmem:[#allocation7 + $0x68] sm:$0xff]
    %v92 = vld [vmem:[#allocation7 + $0x70] sm:$0xff]
    %v93 = vld [vmem:[#allocation7 + $0x78] sm:$0xff]
    %v94 = vld [vmem:[%s3] sm:$0x1]
    %95 = vmatprep.subr.mxu0 0.0
    %96 = vmatpush1.msra.mxu0 %v62
    %97 = vmatprep.subr.mxu0 0.0
    %98 = vmatpush1.msra.mxu0 %v63
    %99 = vmatprep.subr.mxu0 0.0
    %100 = vmatpush1.msra.mxu0 %v64
    %101 = vmatprep.subr.mxu0 0.0
    %102 = vmatpush1.msra.mxu0 %v65
    %103 = vmatprep.subr.mxu0 0.0
    %104 = vmatpush1.msra.mxu0 %v66
    %105 = vmatprep.subr.mxu0 0.0
    %106 = vmatpush1.msra.mxu0 %v67
    %107 = vmatprep.subr.mxu0 0.0
    %108 = vmatpush1.msra.mxu0 %v68
    %109 = vmatprep.subr.mxu0 0.0
    %110 = vmatpush1.msra.mxu0 %v69
    %111 = vmatprep.subr.mxu0 0.0
    %112 = vmatpush1.msra.mxu0 %v70
    %113 = vmatprep.subr.mxu0 0.0
    %114 = vmatpush1.msra.mxu0 %v71
    %115 = vmatprep.subr.mxu0 0.0
    %116 = vmatpush1.msra.mxu0 %v72
    %117 = vmatprep.subr.mxu0 0.0
    %118 = vmatpush1.msra.mxu0 %v73
    %119 = vmatprep.subr.mxu0 0.0
    %120 = vmatpush1.msra.mxu0 %v74
    %121 = vmatprep.subr.mxu0 0.0
    %122 = vmatpush1.msra.mxu0 %v75
    %123 = vmatprep.subr.mxu0 0.0
    %124 = vmatpush1.msra.mxu0 %v76
    %125 = vmatprep.subr.mxu0 0.0
    %126 = vmatpush1.msra.mxu0 %v77
    %127 = vmatprep.subr.mxu0 0.0
    %128 = vmatpush1.msra.mxu0 0.0
    %129 = vmatprep.subr.mxu0 0.0
    %130 = vmatpush1.msra.mxu0 0.0
    %131 = vmatprep.subr.mxu0 0.0
    %132 = vmatpush1.msra.mxu0 0.0
    %133 = vmatprep.subr.mxu0 0.0
    %134 = vmatpush1.msra.mxu0 0.0
    %135 = vmatprep.subr.mxu0 0.0
    %136 = vmatpush1.msra.mxu0 0.0
    %137 = vmatprep.subr.mxu0 0.0
    %138 = vmatpush1.msra.mxu0 0.0
    %139 = vmatprep.subr.mxu0 0.0
    %140 = vmatpush1.msra.mxu0 0.0
    %141 = vmatprep.subr.mxu0 0.0
    %142 = vmatpush1.msra.mxu0 0.0
    %143 = vmatprep.subr.mxu0 0.0
    %144 = vmatpush1.msra.mxu0 0.0
    %145 = vmatprep.subr.mxu0 0.0
    %146 = vmatpush1.msra.mxu0 0.0
    %147 = vmatprep.subr.mxu0 0.0
    %148 = vmatpush1.msra.mxu0 0.0
    %149 = vmatprep.subr.mxu0 0.0
    %150 = vmatpush1.msra.mxu0 0.0
    %151 = vmatprep.subr.mxu0 0.0
    %152 = vmatpush1.msra.mxu0 0.0
    %153 = vmatprep.subr.mxu0 0.0
    %154 = vmatpush1.msra.mxu0 0.0
    %155 = vmatprep.subr.mxu0 0.0
    %156 = vmatpush1.msra.mxu0 0.0
    %157 = vmatprep.subr.mxu0 0.0
    %158 = vmatpush1.msra.mxu0 0.0
    %159 = vmatprep.mubr.f32.mxu0 0.0
    %160 = vmatmul.mubr.f32.gmra.mrb[0].mxu0 0.0
    %v161 = vpop.f32.mrb[0].mxu0
    %v162 = vadd.f32 0.0, %v161
    %v163 = vpop.f32.mrb[0].mxu0
    %164 = vdwg.mxu0
    %v165 = vld [vmem:[#allocation2] sm:$0xff]
    %v166 = vadd.f32 %v165, 0.0
    %v167 = vadd.f32 %v166, %v162
    %vm168 = vcmp.gt.f32.partialorder 0.0, 1.0
    %v169 = vadd.f32 %v167, 0.0
    %v170 = vsel %vm168, 0.0, %v169
    %vm171 = vcmp.gt.f32.partialorder %v170, 1.0
    %v172 = vsel %vm171, 1, 0
    %v173 = vcvt.s32.f32 %v172
    %174 = vst [vmem:[#allocation9] sm:$0xff] %v173
    %v176 = vlaneseq
    %v177 = vshrl.u32 %v176, 7
    %v178 = vsub.s32 0, %v177
    %v179 = vrot.slane %v94, %v178
    %181 = vmatprep.subr.mxu0 0.0
    %182 = vmatpush1.msra.mxu0 %v78
    %183 = vmatprep.subr.mxu0 0.0
    %184 = vmatpush1.msra.mxu0 %v79
    %185 = vmatprep.subr.mxu0 0.0
    %186 = vmatpush1.msra.mxu0 %v80
    %187 = vmatprep.subr.mxu0 0.0
    %188 = vmatpush1.msra.mxu0 %v81
    %189 = vmatprep.subr.mxu0 0.0
    %190 = vmatpush1.msra.mxu0 %v82
    %191 = vmatprep.subr.mxu0 0.0
    %192 = vmatpush1.msra.mxu0 %v83
    %193 = vmatprep.subr.mxu0 0.0
    %194 = vmatpush1.msra.mxu0 %v84
    %195 = vmatprep.subr.mxu0 0.0
    %196 = vmatpush1.msra.mxu0 %v85
    %197 = vmatprep.subr.mxu0 0.0
    %198 = vmatpush1.msra.mxu0 %v86
    %199 = vmatprep.subr.mxu0 0.0
    %200 = vmatpush1.msra.mxu0 %v87
    %201 = vmatprep.subr.mxu0 0.0
    %202 = vmatpush1.msra.mxu0 %v88
    %203 = vmatprep.subr.mxu0 0.0
    %204 = vmatpush1.msra.mxu0 %v89
    %205 = vmatprep.subr.mxu0 0.0
    %206 = vmatpush1.msra.mxu0 %v90
    %207 = vmatprep.subr.mxu0 0.0
    %208 = vmatpush1.msra.mxu0 %v91
    %209 = vmatprep.subr.mxu0 0.0
    %210 = vmatpush1.msra.mxu0 %v92
    %211 = vmatprep.subr.mxu0 0.0
    %212 = vmatpush1.msra.mxu0 %v93
    %213 = vmatprep.subr.mxu0 0.0
    %214 = vmatpush1.msra.mxu0 0.0
    %215 = vmatprep.subr.mxu0 0.0
    %216 = vmatpush1.msra.mxu0 0.0
    %217 = vmatprep.subr.mxu0 0.0
    %218 = vmatpush1.msra.mxu0 0.0
    %219 = vmatprep.subr.mxu0 0.0
    %220 = vmatpush1.msra.mxu0 0.0
    %221 = vmatprep.subr.mxu0 0.0
    %222 = vmatpush1.msra.mxu0 0.0
    %223 = vmatprep.subr.mxu0 0.0
    %224 = vmatpush1.msra.mxu0 0.0
    %225 = vmatprep.subr.mxu0 0.0
    %226 = vmatpush1.msra.mxu0 0.0
    %227 = vmatprep.subr.mxu0 0.0
    %228 = vmatpush1.msra.mxu0 0.0
    %229 = vmatprep.subr.mxu0 0.0
    %230 = vmatpush1.msra.mxu0 0.0
    %231 = vmatprep.subr.mxu0 0.0
    %232 = vmatpush1.msra.mxu0 0.0
    %233 = vmatprep.subr.mxu0 0.0
    %234 = vmatpush1.msra.mxu0 0.0
    %235 = vmatprep.subr.mxu0 0.0
    %236 = vmatpush1.msra.mxu0 0.0
    %237 = vmatprep.subr.mxu0 0.0
    %238 = vmatpush1.msra.mxu0 0.0
    %239 = vmatprep.subr.mxu0 0.0
    %240 = vmatpush1.msra.mxu0 0.0
    %241 = vmatprep.subr.mxu0 0.0
    %242 = vmatpush1.msra.mxu0 0.0
    %243 = vmatprep.subr.mxu0 0.0
    %244 = vmatpush1.msra.mxu0 0.0
    %245 = vmatprep.mubr.f32.mxu0 0.0
    %246 = vmatmul.mubr.f32.gmra.mrb[0].mxu0 %v173
    %v247 = vpop.f32.mrb[0].mxu0
    %v248 = vadd.f32 %v179, %v247
    %v249 = vpop.f32.mrb[0].mxu0
    %250 = vdwg.mxu0
    %v251 = vadd.f32 %v248, 0.0
    %v252 = vadd.f32 %v251, 0.0
    %v253 = vsel %vm168, 0.0, %v252
    %vm254 = vcmp.gt.f32.partialorder %v253, 1.0
    %v255 = vsel %vm254, 1, 0
    %v256 = vcvt.s32.f32 %v255
    %257 = vst [vmem:[#allocation8] sm:$0xff] %v256
    %258 = vmatprep.subr.mxu0 0.0
    %259 = vmatpush1.msra.mxu0 %v62
    %260 = vmatprep.subr.mxu0 0.0
    %261 = vmatpush1.msra.mxu0 %v63
    %262 = vmatprep.subr.mxu0 0.0
    %263 = vmatpush1.msra.mxu0 %v64
    %264 = vmatprep.subr.mxu0 0.0
    %265 = vmatpush1.msra.mxu0 %v65
    %266 = vmatprep.subr.mxu0 0.0
    %267 = vmatpush1.msra.mxu0 %v66
    %268 = vmatprep.subr.mxu0 0.0
    %269 = vmatpush1.msra.mxu0 %v67
    %270 = vmatprep.subr.mxu0 0.0
    %271 = vmatpush1.msra.mxu0 %v68
    %272 = vmatprep.subr.mxu0 0.0
    %273 = vmatpush1.msra.mxu0 %v69
    %274 = vmatprep.subr.mxu0 0.0
    %275 = vmatpush1.msra.mxu0 %v70
    %276 = vmatprep.subr.mxu0 0.0
    %277 = vmatpush1.msra.mxu0 %v71
    %278 = vmatprep.subr.mxu0 0.0
    %279 = vmatpush1.msra.mxu0 %v72
    %280 = vmatprep.subr.mxu0 0.0
    %281 = vmatpush1.msra.mxu0 %v73
    %282 = vmatprep.subr.mxu0 0.0
    %283 = vmatpush1.msra.mxu0 %v74
    %284 = vmatprep.subr.mxu0 0.0
    %285 = vmatpush1.msra.mxu0 %v75
    %286 = vmatprep.subr.mxu0 0.0
    %287 = vmatpush1.msra.mxu0 %v76
    %288 = vmatprep.subr.mxu0 0.0
    %289 = vmatpush1.msra.mxu0 %v77
    %290 = vmatprep.subr.mxu0 0.0
    %291 = vmatpush1.msra.mxu0 0.0
    %292 = vmatprep.subr.mxu0 0.0
    %293 = vmatpush1.msra.mxu0 0.0
    %294 = vmatprep.subr.mxu0 0.0
    %295 = vmatpush1.msra.mxu0 0.0
    %296 = vmatprep.subr.mxu0 0.0
    %297 = vmatpush1.msra.mxu0 0.0
    %298 = vmatprep.subr.mxu0 0.0
    %299 = vmatpush1.msra.mxu0 0.0
    %300 = vmatprep.subr.mxu0 0.0
    %301 = vmatpush1.msra.mxu0 0.0
    %302 = vmatprep.subr.mxu0 0.0
    %303 = vmatpush1.msra.mxu0 0.0
    %304 = vmatprep.subr.mxu0 0.0
    %305 = vmatpush1.msra.mxu0 0.0
    %306 = vmatprep.subr.mxu0 0.0
    %307 = vmatpush1.msra.mxu0 0.0
    %308 = vmatprep.subr.mxu0 0.0
    %309 = vmatpush1.msra.mxu0 0.0
    %310 = vmatprep.subr.mxu0 0.0
    %311 = vmatpush1.msra.mxu0 0.0
    %312 = vmatprep.subr.mxu0 0.0
    %313 = vmatpush1.msra.mxu0 0.0
    %314 = vmatprep.subr.mxu0 0.0
    %315 = vmatpush1.msra.mxu0 0.0
    %316 = vmatprep.subr.mxu0 0.0
    %317 = vmatpush1.msra.mxu0 0.0
    %318 = vmatprep.subr.mxu0 0.0
    %319 = vmatpush1.msra.mxu0 0.0
    %320 = vmatprep.subr.mxu0 0.0
    %321 = vmatpush1.msra.mxu0 0.0
    %322 = vmatprep.mubr.f32.mxu0 0.0
    %323 = vmatmul.mubr.f32.gmra.mrb[0].mxu0 %v173
    %v324 = vpop.f32.mrb[0].mxu0
    %v325 = vadd.f32 0.0, %v324
    %v326 = vpop.f32.mrb[0].mxu0
    %327 = vdwg.mxu0
    %v328 = vmul.f32 %v167, 0.9
    %s329 = scalar_lea.vmem [#allocation2], 8
    %v330 = vld [vmem:[%s329] sm:$0xff]
    %v331 = vadd.f32 %v328, %v330
    %v332 = vadd.f32 %v331, %v325
    %v333 = vmul.f32 %v170, 0.85
    %v334 = vadd.f32 %v333, %v332
    %v335 = vsel %vm171, 0.0, %v334
    %vm336 = vcmp.gt.f32.partialorder %v335, 1.0
    %v337 = vsel %vm336, 1, 0
    %v338 = vcvt.s32.f32 %v337
    %s339 = scalar_lea.vmem [#allocation9], 8
    %340 = vst [vmem:[%s339] sm:$0xff] %v338
    %341 = vmatprep.subr.mxu0 0.0
    %342 = vmatpush1.msra.mxu0 %v78
    %343 = vmatprep.subr.mxu0 0.0
    %344 = vmatpush1.msra.mxu0 %v79
    %345 = vmatprep.subr.mxu0 0.0
    %346 = vmatpush1.msra.mxu0 %v80
    %347 = vmatprep.subr.mxu0 0.0
    %348 = vmatpush1.msra.mxu0 %v81
    %349 = vmatprep.subr.mxu0 0.0
    %350 = vmatpush1.msra.mxu0 %v82
    %351 = vmatprep.subr.mxu0 0.0
    %352 = vmatpush1.msra.mxu0 %v83
    %353 = vmatprep.subr.mxu0 0.0
    %354 = vmatpush1.msra.mxu0 %v84
    %355 = vmatprep.subr.mxu0 0.0
    %356 = vmatpush1.msra.mxu0 %v85
    %357 = vmatprep.subr.mxu0 0.0
    %358 = vmatpush1.msra.mxu0 %v86
    %359 = vmatprep.subr.mxu0 0.0
    %360 = vmatpush1.msra.mxu0 %v87
    %361 = vmatprep.subr.mxu0 0.0
    %362 = vmatpush1.msra.mxu0 %v88
    %363 = vmatprep.subr.mxu0 0.0
    %364 = vmatpush1.msra.mxu0 %v89
    %365 = vmatprep.subr.mxu0 0.0
    %366 = vmatpush1.msra.mxu0 %v90
    %367 = vmatprep.subr.mxu0 0.0
    %368 = vmatpush1.msra.mxu0 %v91
    %369 = vmatprep.subr.mxu0 0.0
    %370 = vmatpush1.msra.mxu0 %v92
    %371 = vmatprep.subr.mxu0 0.0
    %372 = vmatpush1.msra.mxu0 %v93
    %373 = vmatprep.subr.mxu0 0.0
    %374 = vmatpush1.msra.mxu0 0.0
    %375 = vmatprep.subr.mxu0 0.0
    %376 = vmatpush1.msra.mxu0 0.0
    %377 = vmatprep.subr.mxu0 0.0
    %378 = vmatpush1.msra.mxu0 0.0
    %379 = vmatprep.subr.mxu0 0.0
    %380 = vmatpush1.msra.mxu0 0.0
    %381 = vmatprep.subr.mxu0 0.0
    %382 = vmatpush1.msra.mxu0 0.0
    %383 = vmatprep.subr.mxu0 0.0
    %384 = vmatpush1.msra.mxu0 0.0
    %385 = vmatprep.subr.mxu0 0.0
    %386 = vmatpush1.msra.mxu0 0.0
    %387 = vmatprep.subr.mxu0 0.0
    %388 = vmatpush1.msra.mxu0 0.0
    %389 = vmatprep.subr.mxu0 0.0
    %390 = vmatpush1.msra.mxu0 0.0
    %391 = vmatprep.subr.mxu0 0.0
    %392 = vmatpush1.msra.mxu0 0.0
    %393 = vmatprep.subr.mxu0 0.0
    %394 = vmatpush1.msra.mxu0 0.0
    %395 = vmatprep.subr.mxu0 0.0
    %396 = vmatpush1.msra.mxu0 0.0
    %397 = vmatprep.subr.mxu0 0.0
    %398 = vmatpush1.msra.mxu0 0.0
    %399 = vmatprep.subr.mxu0 0.0
    %400 = vmatpush1.msra.mxu0 0.0
    %401 = vmatprep.subr.mxu0 0.0
    %402 = vmatpush1.msra.mxu0 0.0
    %403 = vmatprep.subr.mxu0 0.0
    %404 = vmatpush1.msra.mxu0 0.0
    %405 = vmatprep.mubr.f32.mxu0 0.0
    %406 = vmatmul.mubr.f32.gmra.mrb[0].mxu0 %v338
    %v407 = vpop.f32.mrb[0].mxu0
    %v408 = vadd.f32 %v179, %v407
    %v409 = vpop.f32.mrb[0].mxu0
    %410 = vdwg.mxu0
    %v411 = vmul.f32 %v251, 0.95
    %v412 = vadd.f32 %v411, %v408
    %v413 = vmul.f32 %v253, 0.8
    %v414 = vadd.f32 %v413, %v412
    %v415 = vsel %vm254, 0.0, %v414
    %vm416 = vcmp.gt.f32.partialorder %v415, 1.0
    %v417 = vsel %vm416, 1, 0
    %v418 = vcvt.s32.f32 %v417
    %s419 = scalar_lea.vmem [#allocation8], 8
    %420 = vst [vmem:[%s419] sm:$0xff] %v418
    %421 = vmatprep.subr.mxu0 0.0
    %422 = vmatpush1.msra.mxu0 %v62
    %423 = vmatprep.subr.mxu0 0.0
    %424 = vmatpush1.msra.mxu0 %v63
    %425 = vmatprep.subr.mxu0 0.0
    %426 = vmatpush1.msra.mxu0 %v64
    %427 = vmatprep.subr.mxu0 0.0
    %428 = vmatpush1.msra.mxu0 %v65
    %429 = vmatprep.subr.mxu0 0.0
    %430 = vmatpush1.msra.mxu0 %v66
    %431 = vmatprep.subr.mxu0 0.0
    %432 = vmatpush1.msra.mxu0 %v67
    %433 = vmatprep.subr.mxu0 0.0
    %434 = vmatpush1.msra.mxu0 %v68
    %435 = vmatprep.subr.mxu0 0.0
    %436 = vmatpush1.msra.mxu0 %v69
    %437 = vmatprep.subr.mxu0 0.0
    %438 = vmatpush1.msra.mxu0 %v70
    %439 = vmatprep.subr.mxu0 0.0
    %440 = vmatpush1.msra.mxu0 %v71
    %441 = vmatprep.subr.mxu0 0.0
    %442 = vmatpush1.msra.mxu0 %v72
    %443 = vmatprep.subr.mxu0 0.0
    %444 = vmatpush1.msra.mxu0 %v73
    %445 = vmatprep.subr.mxu0 0.0
    %446 = vmatpush1.msra.mxu0 %v74
    %447 = vmatprep.subr.mxu0 0.0
    %448 = vmatpush1.msra.mxu0 %v75
    %449 = vmatprep.subr.mxu0 0.0
    %450 = vmatpush1.msra.mxu0 %v76
    %451 = vmatprep.subr.mxu0 0.0
    %452 = vmatpush1.msra.mxu0 %v77
    %453 = vmatprep.subr.mxu0 0.0
    %454 = vmatpush1.msra.mxu0 0.0
    %455 = vmatprep.subr.mxu0 0.0
    %456 = vmatpush1.msra.mxu0 0.0
    %457 = vmatprep.subr.mxu0 0.0
    %458 = vmatpush1.msra.mxu0 0.0
    %459 = vmatprep.subr.mxu0 0.0
    %460 = vmatpush1.msra.mxu0 0.0
    %461 = vmatprep.subr.mxu0 0.0
    %462 = vmatpush1.msra.mxu0 0.0
    %463 = vmatprep.subr.mxu0 0.0
    %464 = vmatpush1.msra.mxu0 0.0
    %465 = vmatprep.subr.mxu0 0.0
    %466 = vmatpush1.msra.mxu0 0.0
    %467 = vmatprep.subr.mxu0 0.0
    %468 = vmatpush1.msra.mxu0 0.0
    %469 = vmatprep.subr.mxu0 0.0
    %470 = vmatpush1.msra.mxu0 0.0
    %471 = vmatprep.subr.mxu0 0.0
    %472 = vmatpush1.msra.mxu0 0.0
    %473 = vmatprep.subr.mxu0 0.0
    %474 = vmatpush1.msra.mxu0 0.0
    %475 = vmatprep.subr.mxu0 0.0
    %476 = vmatpush1.msra.mxu0 0.0
    %477 = vmatprep.subr.mxu0 0.0
    %478 = vmatpush1.msra.mxu0 0.0
    %479 = vmatprep.subr.mxu0 0.0
    %480 = vmatpush1.msra.mxu0 0.0
    %481 = vmatprep.subr.mxu0 0.0
    %482 = vmatpush1.msra.mxu0 0.0
    %483 = vmatprep.subr.mxu0 0.0
    %484 = vmatpush1.msra.mxu0 0.0
    %485 = vmatprep.mubr.f32.mxu0 0.0
    %486 = vmatmul.mubr.f32.gmra.mrb[0].mxu0 %v338
    %v487 = vpop.f32.mrb[0].mxu0
    %v488 = vadd.f32 0.0, %v487
    %v489 = vpop.f32.mrb[0].mxu0
    %490 = vdwg.mxu0
    %v491 = vmul.f32 %v332, 0.9
    %s492 = scalar_lea.vmem [#allocation2], 16
    %v493 = vld [vmem:[%s492] sm:$0xff]
    %v494 = vadd.f32 %v491, %v493
    %v495 = vadd.f32 %v494, %v488
    %v496 = vmul.f32 %v335, 0.85
    %v497 = vadd.f32 %v496, %v495
    %v498 = vsel %vm336, 0.0, %v497
    %vm499 = vcmp.gt.f32.partialorder %v498, 1.0
    %v500 = vsel %vm499, 1, 0
    %v501 = vcvt.s32.f32 %v500
    %s502 = scalar_lea.vmem [#allocation9], 16
    %503 = vst [vmem:[%s502] sm:$0xff] %v501
    %504 = vmatprep.subr.mxu0 0.0
    %505 = vmatpush1.msra.mxu0 %v78
    %506 = vmatprep.subr.mxu0 0.0
    %507 = vmatpush1.msra.mxu0 %v79
    %508 = vmatprep.subr.mxu0 0.0
    %509 = vmatpush1.msra.mxu0 %v80
    %510 = vmatprep.subr.mxu0 0.0
    %511 = vmatpush1.msra.mxu0 %v81
    %512 = vmatprep.subr.mxu0 0.0
    %513 = vmatpush1.msra.mxu0 %v82
    %514 = vmatprep.subr.mxu0 0.0
    %515 = vmatpush1.msra.mxu0 %v83
    %516 = vmatprep.subr.mxu0 0.0
    %517 = vmatpush1.msra.mxu0 %v84
    %518 = vmatprep.subr.mxu0 0.0
    %519 = vmatpush1.msra.mxu0 %v85
    %520 = vmatprep.subr.mxu0 0.0
    %521 = vmatpush1.msra.mxu0 %v86
    %522 = vmatprep.subr.mxu0 0.0
    %523 = vmatpush1.msra.mxu0 %v87
    %524 = vmatprep.subr.mxu0 0.0
    %525 = vmatpush1.msra.mxu0 %v88
    %526 = vmatprep.subr.mxu0 0.0
    %527 = vmatpush1.msra.mxu0 %v89
    %528 = vmatprep.subr.mxu0 0.0
    %529 = vmatpush1.msra.mxu0 %v90
    %530 = vmatprep.subr.mxu0 0.0
    %531 = vmatpush1.msra.mxu0 %v91
    %532 = vmatprep.subr.mxu0 0.0
    %533 = vmatpush1.msra.mxu0 %v92
    %534 = vmatprep.subr.mxu0 0.0
    %535 = vmatpush1.msra.mxu0 %v93
    %536 = vmatprep.subr.mxu0 0.0
    %537 = vmatpush1.msra.mxu0 0.0
    %538 = vmatprep.subr.mxu0 0.0
    %539 = vmatpush1.msra.mxu0 0.0
    %540 = vmatprep.subr.mxu0 0.0
    %541 = vmatpush1.msra.mxu0 0.0
    %542 = vmatprep.subr.mxu0 0.0
    %543 = vmatpush1.msra.mxu0 0.0
    %544 = vmatprep.subr.mxu0 0.0
    %545 = vmatpush1.msra.mxu0 0.0
    %546 = vmatprep.subr.mxu0 0.0
    %547 = vmatpush1.msra.mxu0 0.0
    %548 = vmatprep.subr.mxu0 0.0
    %549 = vmatpush1.msra.mxu0 0.0
    %550 = vmatprep.subr.mxu0 0.0
    %551 = vmatpush1.msra.mxu0 0.0
    %552 = vmatprep.subr.mxu0 0.0
    %553 = vmatpush1.msra.mxu0 0.0
    %554 = vmatprep.subr.mxu0 0.0
    %555 = vmatpush1.msra.mxu0 0.0
    %556 = vmatprep.subr.mxu0 0.0
    %557 = vmatpush1.msra.mxu0 0.0
    %558 = vmatprep.subr.mxu0 0.0
    %559 = vmatpush1.msra.mxu0 0.0
    %560 = vmatprep.subr.mxu0 0.0
    %561 = vmatpush1.msra.mxu0 0.0
    %562 = vmatprep.subr.mxu0 0.0
    %563 = vmatpush1.msra.mxu0 0.0
    %564 = vmatprep.subr.mxu0 0.0
    %565 = vmatpush1.msra.mxu0 0.0
    %566 = vmatprep.subr.mxu0 0.0
    %567 = vmatpush1.msra.mxu0 0.0
    %568 = vmatprep.mubr.f32.mxu0 0.0
    %569 = vmatmul.mubr.f32.gmra.mrb[0].mxu0 %v501
    %v570 = vpop.f32.mrb[0].mxu0
    %v571 = vadd.f32 %v179, %v570
    %v572 = vpop.f32.mrb[0].mxu0
    %573 = vdwg.mxu0
    %v574 = vmul.f32 %v412, 0.95
    %v575 = vadd.f32 %v574, %v571
    %v576 = vmul.f32 %v415, 0.8
    %v577 = vadd.f32 %v576, %v575
    %v578 = vsel %vm416, 0.0, %v577
    %vm579 = vcmp.gt.f32.partialorder %v578, 1.0
    %v580 = vsel %vm579, 1, 0
    %v581 = vcvt.s32.f32 %v580
    %s582 = scalar_lea.vmem [#allocation8], 16
    %583 = vst [vmem:[%s582] sm:$0xff] %v581
    %584 = vmatprep.subr.mxu0 0.0
    %585 = vmatpush1.msra.mxu0 %v62
    %586 = vmatprep.subr.mxu0 0.0
    %587 = vmatpush1.msra.mxu0 %v63
    %588 = vmatprep.subr.mxu0 0.0
    %589 = vmatpush1.msra.mxu0 %v64
    %590 = vmatprep.subr.mxu0 0.0
    %591 = vmatpush1.msra.mxu0 %v65
    %592 = vmatprep.subr.mxu0 0.0
    %593 = vmatpush1.msra.mxu0 %v66
    %594 = vmatprep.subr.mxu0 0.0
    %595 = vmatpush1.msra.mxu0 %v67
    %596 = vmatprep.subr.mxu0 0.0
    %597 = vmatpush1.msra.mxu0 %v68
    %598 = vmatprep.subr.mxu0 0.0
    %599 = vmatpush1.msra.mxu0 %v69
    %600 = vmatprep.subr.mxu0 0.0
    %601 = vmatpush1.msra.mxu0 %v70
    %602 = vmatprep.subr.mxu0 0.0
    %603 = vmatpush1.msra.mxu0 %v71
    %604 = vmatprep.subr.mxu0 0.0
    %605 = vmatpush1.msra.mxu0 %v72
    %606 = vmatprep.subr.mxu0 0.0
    %607 = vmatpush1.msra.mxu0 %v73
    %608 = vmatprep.subr.mxu0 0.0
    %609 = vmatpush1.msra.mxu0 %v74
    %610 = vmatprep.subr.mxu0 0.0
    %611 = vmatpush1.msra.mxu0 %v75
    %612 = vmatprep.subr.mxu0 0.0
    %613 = vmatpush1.msra.mxu0 %v76
    %614 = vmatprep.subr.mxu0 0.0
    %615 = vmatpush1.msra.mxu0 %v77
    %616 = vmatprep.subr.mxu0 0.0
    %617 = vmatpush1.msra.mxu0 0.0
    %618 = vmatprep.subr.mxu0 0.0
    %619 = vmatpush1.msra.mxu0 0.0
    %620 = vmatprep.subr.mxu0 0.0
    %621 = vmatpush1.msra.mxu0 0.0
    %622 = vmatprep.subr.mxu0 0.0
    %623 = vmatpush1.msra.mxu0 0.0
    %624 = vmatprep.subr.mxu0 0.0
    %625 = vmatpush1.msra.mxu0 0.0
    %626 = vmatprep.subr.mxu0 0.0
    %627 = vmatpush1.msra.mxu0 0.0
    %628 = vmatprep.subr.mxu0 0.0
    %629 = vmatpush1.msra.mxu0 0.0
    %630 = vmatprep.subr.mxu0 0.0
    %631 = vmatpush1.msra.mxu0 0.0
    %632 = vmatprep.subr.mxu0 0.0
    %633 = vmatpush1.msra.mxu0 0.0
    %634 = vmatprep.subr.mxu0 0.0
    %635 = vmatpush1.msra.mxu0 0.0
    %636 = vmatprep.subr.mxu0 0.0
    %637 = vmatpush1.msra.mxu0 0.0
    %638 = vmatprep.subr.mxu0 0.0
    %639 = vmatpush1.msra.mxu0 0.0
    %640 = vmatprep.subr.mxu0 0.0
    %641 = vmatpush1.msra.mxu0 0.0
    %642 = vmatprep.subr.mxu0 0.0
    %643 = vmatpush1.msra.mxu0 0.0
    %644 = vmatprep.subr.mxu0 0.0
    %645 = vmatpush1.msra.mxu0 0.0
    %646 = vmatprep.subr.mxu0 0.0
    %647 = vmatpush1.msra.mxu0 0.0
    %648 = vmatprep.mubr.f32.mxu0 0.0
    %649 = vmatmul.mubr.f32.gmra.mrb[0].mxu0 %v501
    %v650 = vpop.f32.mrb[0].mxu0
    %v651 = vadd.f32 0.0, %v650
    %v652 = vpop.f32.mrb[0].mxu0
    %653 = vdwg.mxu0
    %v654 = vmul.f32 %v495, 0.9
    %s655 = scalar_lea.vmem [#allocation2], 24
    %v656 = vld [vmem:[%s655] sm:$0xff]
    %v657 = vadd.f32 %v654, %v656
    %v658 = vadd.f32 %v657, %v651
    %v659 = vmul.f32 %v498, 0.85
    %v660 = vadd.f32 %v659, %v658
    %v661 = vsel %vm499, 0.0, %v660
    %vm662 = vcmp.gt.f32.partialorder %v661, 1.0
    %v663 = vsel %vm662, 1, 0
    %v664 = vcvt.s32.f32 %v663
    %s665 = scalar_lea.vmem [#allocation9], 24
    %666 = vst [vmem:[%s665] sm:$0xff] %v664
    %667 = vmatprep.subr.mxu0 0.0
    %668 = vmatpush1.msra.mxu0 %v78
    %669 = vmatprep.subr.mxu0 0.0
    %670 = vmatpush1.msra.mxu0 %v79
    %671 = vmatprep.subr.mxu0 0.0
    %672 = vmatpush1.msra.mxu0 %v80
    %673 = vmatprep.subr.mxu0 0.0
    %674 = vmatpush1.msra.mxu0 %v81
    %675 = vmatprep.subr.mxu0 0.0
    %676 = vmatpush1.msra.mxu0 %v82
    %677 = vmatprep.subr.mxu0 0.0
    %678 = vmatpush1.msra.mxu0 %v83
    %679 = vmatprep.subr.mxu0 0.0
    %680 = vmatpush1.msra.mxu0 %v84
    %681 = vmatprep.subr.mxu0 0.0
    %682 = vmatpush1.msra.mxu0 %v85
    %683 = vmatprep.subr.mxu0 0.0
    %684 = vmatpush1.msra.mxu0 %v86
    %685 = vmatprep.subr.mxu0 0.0
    %686 = vmatpush1.msra.mxu0 %v87
    %687 = vmatprep.subr.mxu0 0.0
    %688 = vmatpush1.msra.mxu0 %v88
    %689 = vmatprep.subr.mxu0 0.0
    %690 = vmatpush1.msra.mxu0 %v89
    %691 = vmatprep.subr.mxu0 0.0
    %692 = vmatpush1.msra.mxu0 %v90
    %693 = vmatprep.subr.mxu0 0.0
    %694 = vmatpush1.msra.mxu0 %v91
    %695 = vmatprep.subr.mxu0 0.0
    %696 = vmatpush1.msra.mxu0 %v92
    %697 = vmatprep.subr.mxu0 0.0
    %698 = vmatpush1.msra.mxu0 %v93
    %699 = vmatprep.subr.mxu0 0.0
    %700 = vmatpush1.msra.mxu0 0.0
    %701 = vmatprep.subr.mxu0 0.0
    %702 = vmatpush1.msra.mxu0 0.0
    %703 = vmatprep.subr.mxu0 0.0
    %704 = vmatpush1.msra.mxu0 0.0
    %705 = vmatprep.subr.mxu0 0.0
    %706 = vmatpush1.msra.mxu0 0.0
    %707 = vmatprep.subr.mxu0 0.0
    %708 = vmatpush1.msra.mxu0 0.0
    %709 = vmatprep.subr.mxu0 0.0
    %710 = vmatpush1.msra.mxu0 0.0
    %711 = vmatprep.subr.mxu0 0.0
    %712 = vmatpush1.msra.mxu0 0.0
    %713 = vmatprep.subr.mxu0 0.0
    %714 = vmatpush1.msra.mxu0 0.0
    %715 = vmatprep.subr.mxu0 0.0
    %716 = vmatpush1.msra.mxu0 0.0
    %717 = vmatprep.subr.mxu0 0.0
    %718 = vmatpush1.msra.mxu0 0.0
    %719 = vmatprep.subr.mxu0 0.0
    %720 = vmatpush1.msra.mxu0 0.0
    %721 = vmatprep.subr.mxu0 0.0
    %722 = vmatpush1.msra.mxu0 0.0
    %723 = vmatprep.subr.mxu0 0.0
    %724 = vmatpush1.msra.mxu0 0.0
    %725 = vmatprep.subr.mxu0 0.0
    %726 = vmatpush1.msra.mxu0 0.0
    %727 = vmatprep.subr.mxu0 0.0
    %728 = vmatpush1.msra.mxu0 0.0
    %729 = vmatprep.subr.mxu0 0.0
    %730 = vmatpush1.msra.mxu0 0.0
    %731 = vmatprep.mubr.f32.mxu0 0.0
    %732 = vmatmul.mubr.f32.gmra.mrb[0].mxu0 %v664
    %v733 = vpop.f32.mrb[0].mxu0
    %v734 = vadd.f32 %v179, %v733
    %v735 = vpop.f32.mrb[0].mxu0
    %736 = vdwg.mxu0
    %v737 = vmul.f32 %v575, 0.95
    %v738 = vadd.f32 %v737, %v734
    %v739 = vmul.f32 %v578, 0.8
    %v740 = vadd.f32 %v739, %v738
    %v741 = vsel %vm579, 0.0, %v740
    %vm742 = vcmp.gt.f32.partialorder %v741, 1.0
    %v743 = vsel %vm742, 1, 0
    %v744 = vcvt.s32.f32 %v743
    %s745 = scalar_lea.vmem [#allocation8], 24
    %746 = vst [vmem:[%s745] sm:$0xff] %v744
    %747 = vmatprep.subr.mxu0 0.0
    %748 = vmatpush1.msra.mxu0 %v62
    %749 = vmatprep.subr.mxu0 0.0
    %750 = vmatpush1.msra.mxu0 %v63
    %751 = vmatprep.subr.mxu0 0.0
    %752 = vmatpush1.msra.mxu0 %v64
    %753 = vmatprep.subr.mxu0 0.0
    %754 = vmatpush1.msra.mxu0 %v65
    %755 = vmatprep.subr.mxu0 0.0
    %756 = vmatpush1.msra.mxu0 %v66
    %757 = vmatprep.subr.mxu0 0.0
    %758 = vmatpush1.msra.mxu0 %v67
    %759 = vmatprep.subr.mxu0 0.0
    %760 = vmatpush1.msra.mxu0 %v68
    %761 = vmatprep.subr.mxu0 0.0
    %762 = vmatpush1.msra.mxu0 %v69
    %763 = vmatprep.subr.mxu0 0.0
    %764 = vmatpush1.msra.mxu0 %v70
    %765 = vmatprep.subr.mxu0 0.0
    %766 = vmatpush1.msra.mxu0 %v71
    %767 = vmatprep.subr.mxu0 0.0
    %768 = vmatpush1.msra.mxu0 %v72
    %769 = vmatprep.subr.mxu0 0.0
    %770 = vmatpush1.msra.mxu0 %v73
    %771 = vmatprep.subr.mxu0 0.0
    %772 = vmatpush1.msra.mxu0 %v74
    %773 = vmatprep.subr.mxu0 0.0
    %774 = vmatpush1.msra.mxu0 %v75
    %775 = vmatprep.subr.mxu0 0.0
    %776 = vmatpush1.msra.mxu0 %v76
    %777 = vmatprep.subr.mxu0 0.0
    %778 = vmatpush1.msra.mxu0 %v77
    %779 = vmatprep.subr.mxu0 0.0
    %780 = vmatpush1.msra.mxu0 0.0
    %781 = vmatprep.subr.mxu0 0.0
    %782 = vmatpush1.msra.mxu0 0.0
    %783 = vmatprep.subr.mxu0 0.0
    %784 = vmatpush1.msra.mxu0 0.0
    %785 = vmatprep.subr.mxu0 0.0
    %786 = vmatpush1.msra.mxu0 0.0
    %787 = vmatprep.subr.mxu0 0.0
    %788 = vmatpush1.msra.mxu0 0.0
    %789 = vmatprep.subr.mxu0 0.0
    %790 = vmatpush1.msra.mxu0 0.0
    %791 = vmatprep.subr.mxu0 0.0
    %792 = vmatpush1.msra.mxu0 0.0
    %793 = vmatprep.subr.mxu0 0.0
    %794 = vmatpush1.msra.mxu0 0.0
    %795 = vmatprep.subr.mxu0 0.0
    %796 = vmatpush1.msra.mxu0 0.0
    %797 = vmatprep.subr.mxu0 0.0
    %798 = vmatpush1.msra.mxu0 0.0
    %799 = vmatprep.subr.mxu0 0.0
    %800 = vmatpush1.msra.mxu0 0.0
    %801 = vmatprep.subr.mxu0 0.0
    %802 = vmatpush1.msra.mxu0 0.0
    %803 = vmatprep.subr.mxu0 0.0
    %804 = vmatpush1.msra.mxu0 0.0
    %805 = vmatprep.subr.mxu0 0.0
    %806 = vmatpush1.msra.mxu0 0.0
    %807 = vmatprep.subr.mxu0 0.0
    %808 = vmatpush1.msra.mxu0 0.0
    %809 = vmatprep.subr.mxu0 0.0
    %810 = vmatpush1.msra.mxu0 0.0
    %811 = vmatprep.mubr.f32.mxu0 0.0
    %812 = vmatmul.mubr.f32.gmra.mrb[0].mxu0 %v664
    %v813 = vpop.f32.mrb[0].mxu0
    %v814 = vadd.f32 0.0, %v813
    %v815 = vpop.f32.mrb[0].mxu0
    %816 = vdwg.mxu0
    %v817 = vmul.f32 %v658, 0.9
    %s818 = scalar_lea.vmem [#allocation2], 32
    %v819 = vld [vmem:[%s818] sm:$0xff]
    %v820 = vadd.f32 %v817, %v819
    %v821 = vadd.f32 %v820, %v814
    %v822 = vmul.f32 %v661, 0.85
    %v823 = vadd.f32 %v822, %v821
    %v824 = vsel %vm662, 0.0, %v823
    %vm825 = vcmp.gt.f32.partialorder %v824, 1.0
    %v826 = vsel %vm825, 1, 0
    %v827 = vcvt.s32.f32 %v826
    %s828 = scalar_lea.vmem [#allocation9], 32
    %829 = vst [vmem:[%s828] sm:$0xff] %v827
    %830 = vmatprep.subr.mxu0 0.0
    %831 = vmatpush1.msra.mxu0 %v78
    %832 = vmatprep.subr.mxu0 0.0
    %833 = vmatpush1.msra.mxu0 %v79
    %834 = vmatprep.subr.mxu0 0.0
    %835 = vmatpush1.msra.mxu0 %v80
    %836 = vmatprep.subr.mxu0 0.0
    %837 = vmatpush1.msra.mxu0 %v81
    %838 = vmatprep.subr.mxu0 0.0
    %839 = vmatpush1.msra.mxu0 %v82
    %840 = vmatprep.subr.mxu0 0.0
    %841 = vmatpush1.msra.mxu0 %v83
    %842 = vmatprep.subr.mxu0 0.0
    %843 = vmatpush1.msra.mxu0 %v84
    %844 = vmatprep.subr.mxu0 0.0
    %845 = vmatpush1.msra.mxu0 %v85
    %846 = vmatprep.subr.mxu0 0.0
    %847 = vmatpush1.msra.mxu0 %v86
    %848 = vmatprep.subr.mxu0 0.0
    %849 = vmatpush1.msra.mxu0 %v87
    %850 = vmatprep.subr.mxu0 0.0
    %851 = vmatpush1.msra.mxu0 %v88
    %852 = vmatprep.subr.mxu0 0.0
    %853 = vmatpush1.msra.mxu0 %v89
    %854 = vmatprep.subr.mxu0 0.0
    %855 = vmatpush1.msra.mxu0 %v90
    %856 = vmatprep.subr.mxu0 0.0
    %857 = vmatpush1.msra.mxu0 %v91
    %858 = vmatprep.subr.mxu0 0.0
    %859 = vmatpush1.msra.mxu0 %v92
    %860 = vmatprep.subr.mxu0 0.0
    %861 = vmatpush1.msra.mxu0 %v93
    %862 = vmatprep.subr.mxu0 0.0
    %863 = vmatpush1.msra.mxu0 0.0
    %864 = vmatprep.subr.mxu0 0.0
    %865 = vmatpush1.msra.mxu0 0.0
    %866 = vmatprep.subr.mxu0 0.0
    %867 = vmatpush1.msra.mxu0 0.0
    %868 = vmatprep.subr.mxu0 0.0
    %869 = vmatpush1.msra.mxu0 0.0
    %870 = vmatprep.subr.mxu0 0.0
    %871 = vmatpush1.msra.mxu0 0.0
    %872 = vmatprep.subr.mxu0 0.0
    %873 = vmatpush1.msra.mxu0 0.0
    %874 = vmatprep.subr.mxu0 0.0
    %875 = vmatpush1.msra.mxu0 0.0
    %876 = vmatprep.subr.mxu0 0.0
    %877 = vmatpush1.msra.mxu0 0.0
    %878 = vmatprep.subr.mxu0 0.0
    %879 = vmatpush1.msra.mxu0 0.0
    %880 = vmatprep.subr.mxu0 0.0
    %881 = vmatpush1.msra.mxu0 0.0
    %882 = vmatprep.subr.mxu0 0.0
    %883 = vmatpush1.msra.mxu0 0.0
    %884 = vmatprep.subr.mxu0 0.0
    %885 = vmatpush1.msra.mxu0 0.0
    %886 = vmatprep.subr.mxu0 0.0
    %887 = vmatpush1.msra.mxu0 0.0
    %888 = vmatprep.subr.mxu0 0.0
    %889 = vmatpush1.msra.mxu0 0.0
    %890 = vmatprep.subr.mxu0 0.0
    %891 = vmatpush1.msra.mxu0 0.0
    %892 = vmatprep.subr.mxu0 0.0
    %893 = vmatpush1.msra.mxu0 0.0
    %894 = vmatprep.mubr.f32.mxu0 0.0
    %895 = vmatmul.mubr.f32.gmra.mrb[0].mxu0 %v827
    %v896 = vpop.f32.mrb[0].mxu0
    %v897 = vadd.f32 %v179, %v896
    %v898 = vpop.f32.mrb[0].mxu0
    %899 = vdwg.mxu0
    %v900 = vmul.f32 %v738, 0.95
    %v901 = vadd.f32 %v900, %v897
    %v902 = vmul.f32 %v741, 0.8
    %v903 = vadd.f32 %v902, %v901
    %v904 = vsel %vm742, 0.0, %v903
    %vm905 = vcmp.gt.f32.partialorder %v904, 1.0
    %v906 = vsel %vm905, 1, 0
    %v907 = vcvt.s32.f32 %v906
    %s908 = scalar_lea.vmem [#allocation8], 32
    %909 = vst [vmem:[%s908] sm:$0xff] %v907
    %910 = vmatprep.subr.mxu0 0.0
    %911 = vmatpush1.msra.mxu0 %v62
    %912 = vmatprep.subr.mxu0 0.0
    %913 = vmatpush1.msra.mxu0 %v63
    %914 = vmatprep.subr.mxu0 0.0
    %915 = vmatpush1.msra.mxu0 %v64
    %916 = vmatprep.subr.mxu0 0.0
    %917 = vmatpush1.msra.mxu0 %v65
    %918 = vmatprep.subr.mxu0 0.0
    %919 = vmatpush1.msra.mxu0 %v66
    %920 = vmatprep.subr.mxu0 0.0
    %921 = vmatpush1.msra.mxu0 %v67
    %922 = vmatprep.subr.mxu0 0.0
    %923 = vmatpush1.msra.mxu0 %v68
    %924 = vmatprep.subr.mxu0 0.0
    %925 = vmatpush1.msra.mxu0 %v69
    %926 = vmatprep.subr.mxu0 0.0
    %927 = vmatpush1.msra.mxu0 %v70
    %928 = vmatprep.subr.mxu0 0.0
    %929 = vmatpush1.msra.mxu0 %v71
    %930 = vmatprep.subr.mxu0 0.0
    %931 = vmatpush1.msra.mxu0 %v72
    %932 = vmatprep.subr.mxu0 0.0
    %933 = vmatpush1.msra.mxu0 %v73
    %934 = vmatprep.subr.mxu0 0.0
    %935 = vmatpush1.msra.mxu0 %v74
    %936 = vmatprep.subr.mxu0 0.0
    %937 = vmatpush1.msra.mxu0 %v75
    %938 = vmatprep.subr.mxu0 0.0
    %939 = vmatpush1.msra.mxu0 %v76
    %940 = vmatprep.subr.mxu0 0.0
    %941 = vmatpush1.msra.mxu0 %v77
    %942 = vmatprep.subr.mxu0 0.0
    %943 = vmatpush1.msra.mxu0 0.0
    %944 = vmatprep.subr.mxu0 0.0
    %945 = vmatpush1.msra.mxu0 0.0
    %946 = vmatprep.subr.mxu0 0.0
    %947 = vmatpush1.msra.mxu0 0.0
    %948 = vmatprep.subr.mxu0 0.0
    %949 = vmatpush1.msra.mxu0 0.0
    %950 = vmatprep.subr.mxu0 0.0
    %951 = vmatpush1.msra.mxu0 0.0
    %952 = vmatprep.subr.mxu0 0.0
    %953 = vmatpush1.msra.mxu0 0.0
    %954 = vmatprep.subr.mxu0 0.0
    %955 = vmatpush1.msra.mxu0 0.0
    %956 = vmatprep.subr.mxu0 0.0
    %957 = vmatpush1.msra.mxu0 0.0
    %958 = vmatprep.subr.mxu0 0.0
    %959 = vmatpush1.msra.mxu0 0.0
    %960 = vmatprep.subr.mxu0 0.0
    %961 = vmatpush1.msra.mxu0 0.0
    %962 = vmatprep.subr.mxu0 0.0
    %963 = vmatpush1.msra.mxu0 0.0
    %964 = vmatprep.subr.mxu0 0.0
    %965 = vmatpush1.msra.mxu0 0.0
    %966 = vmatprep.subr.mxu0 0.0
    %967 = vmatpush1.msra.mxu0 0.0
    %968 = vmatprep.subr.mxu0 0.0
    %969 = vmatpush1.msra.mxu0 0.0
    %970 = vmatprep.subr.mxu0 0.0
    %971 = vmatpush1.msra.mxu0 0.0
    %972 = vmatprep.subr.mxu0 0.0
    %973 = vmatpush1.msra.mxu0 0.0
    %974 = vmatprep.mubr.f32.mxu0 0.0
    %975 = vmatmul.mubr.f32.gmra.mrb[0].mxu0 %v827
    %v976 = vpop.f32.mrb[0].mxu0
    %v977 = vadd.f32 0.0, %v976
    %v978 = vpop.f32.mrb[0].mxu0
    %979 = vdwg.mxu0
    %v980 = vmul.f32 %v821, 0.9
    %s981 = scalar_lea.vmem [#allocation2], 40
    %v982 = vld [vmem:[%s981] sm:$0xff]
    %v983 = vadd.f32 %v980, %v982
    %v984 = vadd.f32 %v983, %v977
    %v985 = vmul.f32 %v824, 0.85
    %v986 = vadd.f32 %v985, %v984
    %v987 = vsel %vm825, 0.0, %v986
    %vm988 = vcmp.gt.f32.partialorder %v987, 1.0
    %v989 = vsel %vm988, 1, 0
    %v990 = vcvt.s32.f32 %v989
    %s991 = scalar_lea.vmem [#allocation9], 40
    %992 = vst [vmem:[%s991] sm:$0xff] %v990
    %993 = vmatprep.subr.mxu0 0.0
    %994 = vmatpush1.msra.mxu0 %v78
    %995 = vmatprep.subr.mxu0 0.0
    %996 = vmatpush1.msra.mxu0 %v79
    %997 = vmatprep.subr.mxu0 0.0
    %998 = vmatpush1.msra.mxu0 %v80
    %999 = vmatprep.subr.mxu0 0.0
    %1000 = vmatpush1.msra.mxu0 %v81
    %1001 = vmatprep.subr.mxu0 0.0
    %1002 = vmatpush1.msra.mxu0 %v82
    %1003 = vmatprep.subr.mxu0 0.0
    %1004 = vmatpush1.msra.mxu0 %v83
    %1005 = vmatprep.subr.mxu0 0.0
    %1006 = vmatpush1.msra.mxu0 %v84
    %1007 = vmatprep.subr.mxu0 0.0
    %1008 = vmatpush1.msra.mxu0 %v85
    %1009 = vmatprep.subr.mxu0 0.0
    %1010 = vmatpush1.msra.mxu0 %v86
    %1011 = vmatprep.subr.mxu0 0.0
    %1012 = vmatpush1.msra.mxu0 %v87
    %1013 = vmatprep.subr.mxu0 0.0
    %1014 = vmatpush1.msra.mxu0 %v88
    %1015 = vmatprep.subr.mxu0 0.0
    %1016 = vmatpush1.msra.mxu0 %v89
    %1017 = vmatprep.subr.mxu0 0.0
    %1018 = vmatpush1.msra.mxu0 %v90
    %1019 = vmatprep.subr.mxu0 0.0
    %1020 = vmatpush1.msra.mxu0 %v91
    %1021 = vmatprep.subr.mxu0 0.0
    %1022 = vmatpush1.msra.mxu0 %v92
    %1023 = vmatprep.subr.mxu0 0.0
    %1024 = vmatpush1.msra.mxu0 %v93
    %1025 = vmatprep.subr.mxu0 0.0
    %1026 = vmatpush1.msra.mxu0 0.0
    %1027 = vmatprep.subr.mxu0 0.0
    %1028 = vmatpush1.msra.mxu0 0.0
    %1029 = vmatprep.subr.mxu0 0.0
    %1030 = vmatpush1.msra.mxu0 0.0
    %1031 = vmatprep.subr.mxu0 0.0
    %1032 = vmatpush1.msra.mxu0 0.0
    %1033 = vmatprep.subr.mxu0 0.0
    %1034 = vmatpush1.msra.mxu0 0.0
    %1035 = vmatprep.subr.mxu0 0.0
    %1036 = vmatpush1.msra.mxu0 0.0
    %1037 = vmatprep.subr.mxu0 0.0
    %1038 = vmatpush1.msra.mxu0 0.0
    %1039 = vmatprep.subr.mxu0 0.0
    %1040 = vmatpush1.msra.mxu0 0.0
    %1041 = vmatprep.subr.mxu0 0.0
    %1042 = vmatpush1.msra.mxu0 0.0
    %1043 = vmatprep.subr.mxu0 0.0
    %1044 = vmatpush1.msra.mxu0 0.0
    %1045 = vmatprep.subr.mxu0 0.0
    %1046 = vmatpush1.msra.mxu0 0.0
    %1047 = vmatprep.subr.mxu0 0.0
    %1048 = vmatpush1.msra.mxu0 0.0
    %1049 = vmatprep.subr.mxu0 0.0
    %1050 = vmatpush1.msra.mxu0 0.0
    %1051 = vmatprep.subr.mxu0 0.0
    %1052 = vmatpush1.msra.mxu0 0.0
    %1053 = vmatprep.subr.mxu0 0.0
    %1054 = vmatpush1.msra.mxu0 0.0
    %1055 = vmatprep.subr.mxu0 0.0
    %1056 = vmatpush1.msra.mxu0 0.0
    %1057 = vmatprep.mubr.f32.mxu0 0.0
    %1058 = vmatmul.mubr.f32.gmra.mrb[0].mxu0 %v990
    %v1059 = vpop.f32.mrb[0].mxu0
    %v1060 = vadd.f32 %v179, %v1059
    %v1061 = vpop.f32.mrb[0].mxu0
    %1062 = vdwg.mxu0
    %v1063 = vmul.f32 %v901, 0.95
    %v1064 = vadd.f32 %v1063, %v1060
    %v1065 = vmul.f32 %v904, 0.8
    %v1066 = vadd.f32 %v1065, %v1064
    %v1067 = vsel %vm905, 0.0, %v1066
    %vm1068 = vcmp.gt.f32.partialorder %v1067, 1.0
    %v1069 = vsel %vm1068, 1, 0
    %v1070 = vcvt.s32.f32 %v1069
    %s1071 = scalar_lea.vmem [#allocation8], 40
    %1072 = vst [vmem:[%s1071] sm:$0xff] %v1070
    %1073 = vmatprep.subr.mxu0 0.0
    %1074 = vmatpush1.msra.mxu0 %v62
    %1075 = vmatprep.subr.mxu0 0.0
    %1076 = vmatpush1.msra.mxu0 %v63
    %1077 = vmatprep.subr.mxu0 0.0
    %1078 = vmatpush1.msra.mxu0 %v64
    %1079 = vmatprep.subr.mxu0 0.0
    %1080 = vmatpush1.msra.mxu0 %v65
    %1081 = vmatprep.subr.mxu0 0.0
    %1082 = vmatpush1.msra.mxu0 %v66
    %1083 = vmatprep.subr.mxu0 0.0
    %1084 = vmatpush1.msra.mxu0 %v67
    %1085 = vmatprep.subr.mxu0 0.0
    %1086 = vmatpush1.msra.mxu0 %v68
    %1087 = vmatprep.subr.mxu0 0.0
    %1088 = vmatpush1.msra.mxu0 %v69
    %1089 = vmatprep.subr.mxu0 0.0
    %1090 = vmatpush1.msra.mxu0 %v70
    %1091 = vmatprep.subr.mxu0 0.0
    %1092 = vmatpush1.msra.mxu0 %v71
    %1093 = vmatprep.subr.mxu0 0.0
    %1094 = vmatpush1.msra.mxu0 %v72
    %1095 = vmatprep.subr.mxu0 0.0
    %1096 = vmatpush1.msra.mxu0 %v73
    %1097 = vmatprep.subr.mxu0 0.0
    %1098 = vmatpush1.msra.mxu0 %v74
    %1099 = vmatprep.subr.mxu0 0.0
    %1100 = vmatpush1.msra.mxu0 %v75
    %1101 = vmatprep.subr.mxu0 0.0
    %1102 = vmatpush1.msra.mxu0 %v76
    %1103 = vmatprep.subr.mxu0 0.0
    %1104 = vmatpush1.msra.mxu0 %v77
    %1105 = vmatprep.subr.mxu0 0.0
    %1106 = vmatpush1.msra.mxu0 0.0
    %1107 = vmatprep.subr.mxu0 0.0
    %1108 = vmatpush1.msra.mxu0 0.0
    %1109 = vmatprep.subr.mxu0 0.0
    %1110 = vmatpush1.msra.mxu0 0.0
    %1111 = vmatprep.subr.mxu0 0.0
    %1112 = vmatpush1.msra.mxu0 0.0
    %1113 = vmatprep.subr.mxu0 0.0
    %1114 = vmatpush1.msra.mxu0 0.0
    %1115 = vmatprep.subr.mxu0 0.0
    %1116 = vmatpush1.msra.mxu0 0.0
    %1117 = vmatprep.subr.mxu0 0.0
    %1118 = vmatpush1.msra.mxu0 0.0
    %1119 = vmatprep.subr.mxu0 0.0
    %1120 = vmatpush1.msra.mxu0 0.0
    %1121 = vmatprep.subr.mxu0 0.0
    %1122 = vmatpush1.msra.mxu0 0.0
    %1123 = vmatprep.subr.mxu0 0.0
    %1124 = vmatpush1.msra.mxu0 0.0
    %1125 = vmatprep.subr.mxu0 0.0
    %1126 = vmatpush1.msra.mxu0 0.0
    %1127 = vmatprep.subr.mxu0 0.0
    %1128 = vmatpush1.msra.mxu0 0.0
    %1129 = vmatprep.subr.mxu0 0.0
    %1130 = vmatpush1.msra.mxu0 0.0
    %1131 = vmatprep.subr.mxu0 0.0
    %1132 = vmatpush1.msra.mxu0 0.0
    %1133 = vmatprep.subr.mxu0 0.0
    %1134 = vmatpush1.msra.mxu0 0.0
    %1135 = vmatprep.subr.mxu0 0.0
    %1136 = vmatpush1.msra.mxu0 0.0
    %1137 = vmatprep.mubr.f32.mxu0 0.0
    %1138 = vmatmul.mubr.f32.gmra.mrb[0].mxu0 %v990
    %v1139 = vpop.f32.mrb[0].mxu0
    %v1140 = vadd.f32 0.0, %v1139
    %v1141 = vpop.f32.mrb[0].mxu0
    %1142 = vdwg.mxu0
    %v1143 = vmul.f32 %v984, 0.9
    %s1144 = scalar_lea.vmem [#allocation2], 48
    %v1145 = vld [vmem:[%s1144] sm:$0xff]
    %v1146 = vadd.f32 %v1143, %v1145
    %v1147 = vadd.f32 %v1146, %v1140
    %v1148 = vmul.f32 %v987, 0.85
    %v1149 = vadd.f32 %v1148, %v1147
    %v1150 = vsel %vm988, 0.0, %v1149
    %vm1151 = vcmp.gt.f32.partialorder %v1150, 1.0
    %v1152 = vsel %vm1151, 1, 0
    %v1153 = vcvt.s32.f32 %v1152
    %s1154 = scalar_lea.vmem [#allocation9], 48
    %1155 = vst [vmem:[%s1154] sm:$0xff] %v1153
    %1156 = vmatprep.subr.mxu0 0.0
    %1157 = vmatpush1.msra.mxu0 %v78
    %1158 = vmatprep.subr.mxu0 0.0
    %1159 = vmatpush1.msra.mxu0 %v79
    %1160 = vmatprep.subr.mxu0 0.0
    %1161 = vmatpush1.msra.mxu0 %v80
    %1162 = vmatprep.subr.mxu0 0.0
    %1163 = vmatpush1.msra.mxu0 %v81
    %1164 = vmatprep.subr.mxu0 0.0
    %1165 = vmatpush1.msra.mxu0 %v82
    %1166 = vmatprep.subr.mxu0 0.0
    %1167 = vmatpush1.msra.mxu0 %v83
    %1168 = vmatprep.subr.mxu0 0.0
    %1169 = vmatpush1.msra.mxu0 %v84
    %1170 = vmatprep.subr.mxu0 0.0
    %1171 = vmatpush1.msra.mxu0 %v85
    %1172 = vmatprep.subr.mxu0 0.0
    %1173 = vmatpush1.msra.mxu0 %v86
    %1174 = vmatprep.subr.mxu0 0.0
    %1175 = vmatpush1.msra.mxu0 %v87
    %1176 = vmatprep.subr.mxu0 0.0
    %1177 = vmatpush1.msra.mxu0 %v88
    %1178 = vmatprep.subr.mxu0 0.0
    %1179 = vmatpush1.msra.mxu0 %v89
    %1180 = vmatprep.subr.mxu0 0.0
    %1181 = vmatpush1.msra.mxu0 %v90
    %1182 = vmatprep.subr.mxu0 0.0
    %1183 = vmatpush1.msra.mxu0 %v91
    %1184 = vmatprep.subr.mxu0 0.0
    %1185 = vmatpush1.msra.mxu0 %v92
    %1186 = vmatprep.subr.mxu0 0.0
    %1187 = vmatpush1.msra.mxu0 %v93
    %1188 = vmatprep.subr.mxu0 0.0
    %1189 = vmatpush1.msra.mxu0 0.0
    %1190 = vmatprep.subr.mxu0 0.0
    %1191 = vmatpush1.msra.mxu0 0.0
    %1192 = vmatprep.subr.mxu0 0.0
    %1193 = vmatpush1.msra.mxu0 0.0
    %1194 = vmatprep.subr.mxu0 0.0
    %1195 = vmatpush1.msra.mxu0 0.0
    %1196 = vmatprep.subr.mxu0 0.0
    %1197 = vmatpush1.msra.mxu0 0.0
    %1198 = vmatprep.subr.mxu0 0.0
    %1199 = vmatpush1.msra.mxu0 0.0
    %1200 = vmatprep.subr.mxu0 0.0
    %1201 = vmatpush1.msra.mxu0 0.0
    %1202 = vmatprep.subr.mxu0 0.0
    %1203 = vmatpush1.msra.mxu0 0.0
    %1204 = vmatprep.subr.mxu0 0.0
    %1205 = vmatpush1.msra.mxu0 0.0
    %1206 = vmatprep.subr.mxu0 0.0
    %1207 = vmatpush1.msra.mxu0 0.0
    %1208 = vmatprep.subr.mxu0 0.0
    %1209 = vmatpush1.msra.mxu0 0.0
    %1210 = vmatprep.subr.mxu0 0.0
    %1211 = vmatpush1.msra.mxu0 0.0
    %1212 = vmatprep.subr.mxu0 0.0
    %1213 = vmatpush1.msra.mxu0 0.0
    %1214 = vmatprep.subr.mxu0 0.0
    %1215 = vmatpush1.msra.mxu0 0.0
    %1216 = vmatprep.subr.mxu0 0.0
    %1217 = vmatpush1.msra.mxu0 0.0
    %1218 = vmatprep.subr.mxu0 0.0
    %1219 = vmatpush1.msra.mxu0 0.0
    %1220 = vmatprep.mubr.f32.mxu0 0.0
    %1221 = vmatmul.mubr.f32.gmra.mrb[0].mxu0 %v1153
    %v1222 = vpop.f32.mrb[0].mxu0
    %v1223 = vadd.f32 %v179, %v1222
    %v1224 = vpop.f32.mrb[0].mxu0
    %1225 = vdwg.mxu0
    %v1226 = vmul.f32 %v1064, 0.95
    %v1227 = vadd.f32 %v1226, %v1223
    %v1228 = vmul.f32 %v1067, 0.8
    %v1229 = vadd.f32 %v1228, %v1227
    %v1230 = vsel %vm1068, 0.0, %v1229
    %vm1231 = vcmp.gt.f32.partialorder %v1230, 1.0
    %v1232 = vsel %vm1231, 1, 0
    %v1233 = vcvt.s32.f32 %v1232
    %s1234 = scalar_lea.vmem [#allocation8], 48
    %1235 = vst [vmem:[%s1234] sm:$0xff] %v1233
    %1236 = vmatprep.subr.mxu0 0.0
    %1237 = vmatpush1.msra.mxu0 %v62
    %1238 = vmatprep.subr.mxu0 0.0
    %1239 = vmatpush1.msra.mxu0 %v63
    %1240 = vmatprep.subr.mxu0 0.0
    %1241 = vmatpush1.msra.mxu0 %v64
    %1242 = vmatprep.subr.mxu0 0.0
    %1243 = vmatpush1.msra.mxu0 %v65
    %1244 = vmatprep.subr.mxu0 0.0
    %1245 = vmatpush1.msra.mxu0 %v66
    %1246 = vmatprep.subr.mxu0 0.0
    %1247 = vmatpush1.msra.mxu0 %v67
    %1248 = vmatprep.subr.mxu0 0.0
    %1249 = vmatpush1.msra.mxu0 %v68
    %1250 = vmatprep.subr.mxu0 0.0
    %1251 = vmatpush1.msra.mxu0 %v69
    %1252 = vmatprep.subr.mxu0 0.0
    %1253 = vmatpush1.msra.mxu0 %v70
    %1254 = vmatprep.subr.mxu0 0.0
    %1255 = vmatpush1.msra.mxu0 %v71
    %1256 = vmatprep.subr.mxu0 0.0
    %1257 = vmatpush1.msra.mxu0 %v72
    %1258 = vmatprep.subr.mxu0 0.0
    %1259 = vmatpush1.msra.mxu0 %v73
    %1260 = vmatprep.subr.mxu0 0.0
    %1261 = vmatpush1.msra.mxu0 %v74
    %1262 = vmatprep.subr.mxu0 0.0
    %1263 = vmatpush1.msra.mxu0 %v75
    %1264 = vmatprep.subr.mxu0 0.0
    %1265 = vmatpush1.msra.mxu0 %v76
    %1266 = vmatprep.subr.mxu0 0.0
    %1267 = vmatpush1.msra.mxu0 %v77
    %1268 = vmatprep.subr.mxu0 0.0
    %1269 = vmatpush1.msra.mxu0 0.0
    %1270 = vmatprep.subr.mxu0 0.0
    %1271 = vmatpush1.msra.mxu0 0.0
    %1272 = vmatprep.subr.mxu0 0.0
    %1273 = vmatpush1.msra.mxu0 0.0
    %1274 = vmatprep.subr.mxu0 0.0
    %1275 = vmatpush1.msra.mxu0 0.0
    %1276 = vmatprep.subr.mxu0 0.0
    %1277 = vmatpush1.msra.mxu0 0.0
    %1278 = vmatprep.subr.mxu0 0.0
    %1279 = vmatpush1.msra.mxu0 0.0
    %1280 = vmatprep.subr.mxu0 0.0
    %1281 = vmatpush1.msra.mxu0 0.0
    %1282 = vmatprep.subr.mxu0 0.0
    %1283 = vmatpush1.msra.mxu0 0.0
    %1284 = vmatprep.subr.mxu0 0.0
    %1285 = vmatpush1.msra.mxu0 0.0
    %1286 = vmatprep.subr.mxu0 0.0
    %1287 = vmatpush1.msra.mxu0 0.0
    %1288 = vmatprep.subr.mxu0 0.0
    %1289 = vmatpush1.msra.mxu0 0.0
    %1290 = vmatprep.subr.mxu0 0.0
    %1291 = vmatpush1.msra.mxu0 0.0
    %1292 = vmatprep.subr.mxu0 0.0
    %1293 = vmatpush1.msra.mxu0 0.0
    %1294 = vmatprep.subr.mxu0 0.0
    %1295 = vmatpush1.msra.mxu0 0.0
    %1296 = vmatprep.subr.mxu0 0.0
    %1297 = vmatpush1.msra.mxu0 0.0
    %1298 = vmatprep.subr.mxu0 0.0
    %1299 = vmatpush1.msra.mxu0 0.0
    %1300 = vmatprep.mubr.f32.mxu0 0.0
    %1301 = vmatmul.mubr.f32.gmra.mrb[0].mxu0 %v1153
    %v1302 = vpop.f32.mrb[0].mxu0
    %v1303 = vadd.f32 0.0, %v1302
    %v1304 = vpop.f32.mrb[0].mxu0
    %1305 = vdwg.mxu0
    %v1306 = vmul.f32 %v1147, 0.9
    %s1307 = scalar_lea.vmem [#allocation2], 56
    %v1308 = vld [vmem:[%s1307] sm:$0xff]
    %v1309 = vadd.f32 %v1306, %v1308
    %v1310 = vadd.f32 %v1309, %v1303
    %v1311 = vmul.f32 %v1150, 0.85
    %v1312 = vadd.f32 %v1311, %v1310
    %v1313 = vsel %vm1151, 0.0, %v1312
    %vm1314 = vcmp.gt.f32.partialorder %v1313, 1.0
    %v1315 = vsel %vm1314, 1, 0
    %v1316 = vcvt.s32.f32 %v1315
    %s1317 = scalar_lea.vmem [#allocation9], 56
    %1318 = vst [vmem:[%s1317] sm:$0xff] %v1316
    %1319 = vmatprep.subr.mxu0 0.0
    %1320 = vmatpush1.msra.mxu0 %v78
    %1321 = vmatprep.subr.mxu0 0.0
    %1322 = vmatpush1.msra.mxu0 %v79
    %1323 = vmatprep.subr.mxu0 0.0
    %1324 = vmatpush1.msra.mxu0 %v80
    %1325 = vmatprep.subr.mxu0 0.0
    %1326 = vmatpush1.msra.mxu0 %v81
    %1327 = vmatprep.subr.mxu0 0.0
    %1328 = vmatpush1.msra.mxu0 %v82
    %1329 = vmatprep.subr.mxu0 0.0
    %1330 = vmatpush1.msra.mxu0 %v83
    %1331 = vmatprep.subr.mxu0 0.0
    %1332 = vmatpush1.msra.mxu0 %v84
    %1333 = vmatprep.subr.mxu0 0.0
    %1334 = vmatpush1.msra.mxu0 %v85
    %1335 = vmatprep.subr.mxu0 0.0
    %1336 = vmatpush1.msra.mxu0 %v86
    %1337 = vmatprep.subr.mxu0 0.0
    %1338 = vmatpush1.msra.mxu0 %v87
    %1339 = vmatprep.subr.mxu0 0.0
    %1340 = vmatpush1.msra.mxu0 %v88
    %1341 = vmatprep.subr.mxu0 0.0
    %1342 = vmatpush1.msra.mxu0 %v89
    %1343 = vmatprep.subr.mxu0 0.0
    %1344 = vmatpush1.msra.mxu0 %v90
    %1345 = vmatprep.subr.mxu0 0.0
    %1346 = vmatpush1.msra.mxu0 %v91
    %1347 = vmatprep.subr.mxu0 0.0
    %1348 = vmatpush1.msra.mxu0 %v92
    %1349 = vmatprep.subr.mxu0 0.0
    %1350 = vmatpush1.msra.mxu0 %v93
    %1351 = vmatprep.subr.mxu0 0.0
    %1352 = vmatpush1.msra.mxu0 0.0
    %1353 = vmatprep.subr.mxu0 0.0
    %1354 = vmatpush1.msra.mxu0 0.0
    %1355 = vmatprep.subr.mxu0 0.0
    %1356 = vmatpush1.msra.mxu0 0.0
    %1357 = vmatprep.subr.mxu0 0.0
    %1358 = vmatpush1.msra.mxu0 0.0
    %1359 = vmatprep.subr.mxu0 0.0
    %1360 = vmatpush1.msra.mxu0 0.0
    %1361 = vmatprep.subr.mxu0 0.0
    %1362 = vmatpush1.msra.mxu0 0.0
    %1363 = vmatprep.subr.mxu0 0.0
    %1364 = vmatpush1.msra.mxu0 0.0
    %1365 = vmatprep.subr.mxu0 0.0
    %1366 = vmatpush1.msra.mxu0 0.0
    %1367 = vmatprep.subr.mxu0 0.0
    %1368 = vmatpush1.msra.mxu0 0.0
    %1369 = vmatprep.subr.mxu0 0.0
    %1370 = vmatpush1.msra.mxu0 0.0
    %1371 = vmatprep.subr.mxu0 0.0
    %1372 = vmatpush1.msra.mxu0 0.0
    %1373 = vmatprep.subr.mxu0 0.0
    %1374 = vmatpush1.msra.mxu0 0.0
    %1375 = vmatprep.subr.mxu0 0.0
    %1376 = vmatpush1.msra.mxu0 0.0
    %1377 = vmatprep.subr.mxu0 0.0
    %1378 = vmatpush1.msra.mxu0 0.0
    %1379 = vmatprep.subr.mxu0 0.0
    %1380 = vmatpush1.msra.mxu0 0.0
    %1381 = vmatprep.subr.mxu0 0.0
    %1382 = vmatpush1.msra.mxu0 0.0
    %1383 = vmatprep.mubr.f32.mxu0 0.0
    %1384 = vmatmul.mubr.f32.gmra.mrb[0].mxu0 %v1316
    %v1385 = vpop.f32.mrb[0].mxu0
    %v1386 = vadd.f32 %v179, %v1385
    %v1387 = vpop.f32.mrb[0].mxu0
    %1388 = vdwg.mxu0
    %v1389 = vmul.f32 %v1227, 0.95
    %v1390 = vadd.f32 %v1389, %v1386
    %v1391 = vmul.f32 %v1230, 0.8
    %v1392 = vadd.f32 %v1391, %v1390
    %v1393 = vsel %vm1231, 0.0, %v1392
    %vm1394 = vcmp.gt.f32.partialorder %v1393, 1.0
    %v1395 = vsel %vm1394, 1, 0
    %v1396 = vcvt.s32.f32 %v1395
    %s1397 = scalar_lea.vmem [#allocation8], 56
    %1398 = vst [vmem:[%s1397] sm:$0xff] %v1396
    // Predicated region
    $region30: #{tpu_custom_call.1} parent=1 // pred_check
      _
    $region31: #{tpu_custom_call.1} parent=1 // pred_check_branch
      %1400 = sbr.rel (0) target = $region33
    $region32: #{tpu_custom_call.1} parent=1 // pred_region
      %s1402 = ssub.s32 1024, 1024
      %1403 = vsyncadd [#allocation4], %s1402
      %s1404 = sshll.u32 [#allocation8], 4
      %s1405 = int_to_ptr.vmem [resolvable:$true] %s1404
      %1410 = dma.vmem_to_hbm [thread:$0]  %s1405, 1024, %s4, [#allocation4], 128, 128, 8
    $region33: #{tpu_custom_call.1} parent=1 // pred_fallthru
      _
    // Predicated region
    $region34: #{tpu_custom_call.1} parent=1 // pred_check
      _
    $region35: #{tpu_custom_call.1} parent=1 // pred_check_branch
      %1412 = sbr.rel (0) target = $region37
    $region36: #{tpu_custom_call.1} parent=1 // pred_region
      %s1414 = ssub.s32 1024, 1024
      %1415 = vsyncadd [#allocation10], %s1414
      %s1416 = sshll.u32 [#allocation9], 4
      %s1417 = int_to_ptr.vmem [resolvable:$true] %s1416
      %1422 = dma.vmem_to_hbm [thread:$0]  %s1417, 1024, %s5, [#allocation10], 128, 128, 8
    $region37: #{tpu_custom_call.1} parent=1 // pred_fallthru
      _
    // Predicated region
    $region38: #{tpu_custom_call.1} parent=1 // pred_check
      _
    $region39: #{tpu_custom_call.1} parent=1 // pred_check_branch
      %1424 = sbr.rel (0) target = $region41
    $region40: #{tpu_custom_call.1} parent=1 // pred_region
      %1425 = dma.done [#allocation4], 1024
    $region41: #{tpu_custom_call.1} parent=1 // pred_fallthru
      _
    // Predicated region
    $region42: #{tpu_custom_call.1} parent=1 // pred_check
      _
    $region43: #{tpu_custom_call.1} parent=1 // pred_check_branch
      %1427 = sbr.rel (0) target = $region45
    $region44: #{tpu_custom_call.1} parent=1 // pred_region
      %1428 = dma.done [#allocation10], 1024
    $region45: #{tpu_custom_call.1} parent=1 // pred_fallthru
      _
    %1429 = vsyncpa [#allocation3], 1
    %1430 = vsyncpa [#allocation6], 1
    %1431 = vsyncpa [#allocation4], 1
    %1432 = vsyncpa [#allocation10], 1

</llo_original>
